<compile_context>
chip_gen: v6e
topology: v6e:2x2x1
jax: 0.10.0
libtpu: 0.0.40
codegen_flags: <defaults>
</compile_context>

<pallas_src>
import functools

import jax
import jax.numpy as jnp
from jax.experimental import pallas as pl
from jax.experimental.pallas import tpu as pltpu


def _round_up(v, m):
    return ((v + m - 1) // m) * m


def _pad_gates_last(a, H, Hp):
    """Pad the last axis (gate-packed r|z|n of length 3H) to 3*Hp, per-gate zeros."""
    if Hp == H:
        return a
    r, z, n = jnp.split(a, 3, axis=-1)
    pad = [(0, 0)] * (a.ndim - 1) + [(0, Hp - H)]
    return jnp.concatenate([jnp.pad(g, pad) for g in (r, z, n)], axis=-1)


def _sigmoid_eup(x):
    # sigmoid via tanh: transcendental stays on the EUP slot, no VPU divide.
    return 0.5 * jnp.tanh(0.5 * x) + 0.5


def _gru_fused_kernel(x_ref, h0_ref, wih_ref, whh_ref, bi_ref, bhn_ref,
                      out_ref, h_scratch, *,
                      time_block, hidden_p, seq_len, matmul_dtype):
    """One (batch-shard, time-chunk) grid cell: fused input projection + GRU steps.

    x_ref:    (Bb, TB, I)   raw input chunk (cast to matmul_dtype in-kernel)
    h0_ref:   (Bb, Hp) f32  initial hidden state (used only at time-chunk 0)
    wih_ref:  (I, 3Hp)      W_ih^T, gate-lane-padded   (VMEM-resident invariant)
    whh_ref:  (Hp, 3Hp)     W_hh^T, gate-lane-padded   (VMEM-resident invariant)
    bi_ref:   (1, 3Hp) f32  b_ih with b_hr/b_hz folded in (invariant)
    bhn_ref:  (1, Hp)  f32  b_hn (must stay inside the recurrence)
    out_ref:  (Bb, TB, Hp)  per-step hidden states (batch-first output block)
    h_scratch:(Bb, Hp) f32  hidden state carried across time chunks
    """
    tc = pl.program_id(1)

    @pl.when(tc == 0)
    def _():
        h_scratch[...] = h0_ref[...]

    Hp = hidden_p
    Bb, TB, I = x_ref.shape

    # ---- Off the serial chain: input projection for the whole chunk --------
    # One (Bb*TB, I) @ (I, 3Hp) matmul; b_ih (+ folded b_hr, b_hz) added here.
    x2 = x_ref[...].reshape(Bb * TB, I).astype(matmul_dtype)
    gi = jnp.dot(x2, wih_ref[...], preferred_element_type=jnp.float32) + bi_ref[...]
    gi = gi.reshape(Bb, TB, 3 * Hp)                        # f32, stays in VMEM/vregs

    # Loop invariants hoisted out of the unrolled recurrence.
    whh = whh_ref[...]                                     # (Hp, 3Hp) matmul_dtype
    bhn = jnp.broadcast_to(bhn_ref[...], (Bb, Hp))         # f32, broadcast once

    h = h_scratch[...]                                     # f32 (Bb, Hp)
    ragged = (seq_len % time_block) != 0                   # static Python bool

    # TODO(synk): for large Hp (~1024) switch this full unroll to
    # lax.fori_loop(..., unroll=4-8) with pl.ds indexing to bound instruction
    # footprint / vreg live ranges; and verify from the bundle dump that the
    # compiler hoists the W_hh^T MXU weight push out of the unrolled loop
    # (else drive it with pltpu.matmul_push_rhs / matmul_acc_lhs / matmul_pop).
    for tt in range(time_block):
        gi_t = gi[:, tt, :]                                # (Bb, 3Hp) f32, lane-aligned
        gh = jnp.dot(h.astype(matmul_dtype), whh,
                     preferred_element_type=jnp.float32)   # (Bb, 3Hp) f32
        r = _sigmoid_eup(gi_t[:, :Hp] + gh[:, :Hp])        # biases already folded
        z = _sigmoid_eup(gi_t[:, Hp:2 * Hp] + gh[:, Hp:2 * Hp])
        n = jnp.tanh(gi_t[:, 2 * Hp:] + r * (gh[:, 2 * Hp:] + bhn))
        h_new = (1.0 - z) * n + z * h                      # f32 gate math (v5e-safe)
        if ragged:
            # Guard steps past T: boundary-pad garbage (even NaN) never reaches h.
            valid = (tc * time_block + tt) < seq_len
            h_new = jnp.where(valid, h_new, h)
        h = h_new
        out_ref[:, tt, :] = h.astype(out_ref.dtype)        # lane-dense (Hp % 128 == 0)

    h_scratch[...] = h


@functools.partial(
    jax.jit,
    static_argnames=("time_block", "batch_block", "matmul_dtype", "out_dtype",
                     "vmem_limit_bytes"))
def rnn_encoder_forward(x, h0, w_ih, w_hh, b_ih, b_hh, *,
                        time_block=None, batch_block=None,
                        matmul_dtype=jnp.bfloat16, out_dtype=None,
                        vmem_limit_bytes=48 * 1024 * 1024):
    """GRU forward matching torch.nn.GRU(..., num_layers=1, batch_first=True).

    Args:
      x:    (B, T, I) input sequence (batch-first)
      h0:   (1, B, H) initial hidden state (pass zeros for h=None)
      w_ih: (3H, I), w_hh: (3H, H), b_ih: (3H,), b_hh: (3H,)
      time_block:  GRU steps per grid invocation; multiple of 8 or == T.
                   Default min(T, 32); raise to 64-128 on 128 MiB-VMEM v5e/v6e.
      batch_block: batch rows per shard (multiple of 8 or == B).  Pass B//2 on
                   v7x so the leading "parallel" axis splits both TensorCores.
      matmul_dtype: operand dtype for the MXU matmuls (bf16 default on all
                    generations; accumulation and gate math stay f32).
      out_dtype:   output / h_n dtype (default: parameter dtype, like torch).
                   Pass bf16 on v7x to halve the output writeback stream.
      vmem_limit_bytes: scoped VMEM limit (48 MiB default is v7x-safe; up to
                    ~100 MiB is available on v5e/v6e for larger chunks).
    Returns:
      output: (B, T, H), h_n: (1, B, H)
    """
    B, T, I = x.shape
    H = w_hh.shape[1]
    Hp = _round_up(H, 128)          # lane-pad each gate → lane-dense slices/stores
    G3p = 3 * Hp

    if time_block is None:
        time_block = T if T <= 32 else 32        # == T or a multiple of 8
    if batch_block is None:
        batch_block = B                          # keep a multiple of 8 (or == B)
    if out_dtype is None:
        out_dtype = w_hh.dtype                   # torch returns param-dtype states

    # --------- Pack weights / biases (gate lane padding + bias folding) ---------
    # gi bias carries b_ih plus the hidden-side r/z biases; only b_hn stays in the
    # loop because torch applies it as r * (W_hn h + b_hn).
    wih_t = _pad_gates_last(jnp.transpose(w_ih), H, Hp).astype(matmul_dtype)  # (I, 3Hp)
    whh_t = _pad_gates_last(jnp.transpose(w_hh), H, Hp)                       # (H, 3Hp)
    if Hp != H:
        whh_t = jnp.pad(whh_t, ((0, Hp - H), (0, 0)))                         # (Hp, 3Hp)
    whh_t = whh_t.astype(matmul_dtype)

    bias_gi = b_ih + jnp.concatenate([b_hh[:2 * H], jnp.zeros((H,), b_hh.dtype)])
    bias_gi = _pad_gates_last(bias_gi.reshape(1, 3 * H), H, Hp).astype(jnp.float32)
    bias_hn = b_hh[2 * H:].reshape(1, H).astype(jnp.float32)
    if Hp != H:
        bias_hn = jnp.pad(bias_hn, ((0, 0), (0, Hp - H)))

    h0_p = h0[0].astype(jnp.float32)             # (B, H) f32
    if Hp != H:
        h0_p = jnp.pad(h0_p, ((0, 0), (0, Hp - H)))   # pad lanes stay exactly 0

    n_b = pl.cdiv(B, batch_block)
    n_tc = pl.cdiv(T, time_block)

    kernel = functools.partial(_gru_fused_kernel, time_block=time_block,
                               hidden_p=Hp, seq_len=T, matmul_dtype=matmul_dtype)

    # Loop-invariant operands: whole-array, single VMEM-resident copy (no
    # per-grid-step pipelining / double buffering of the big weights).
    def _vmem_resident():
        return pl.BlockSpec(memory_space=pltpu.MemorySpace.VMEM)

    out_p = pl.pallas_call(
        kernel,
        grid_spec=pltpu.PrefetchScalarGridSpec(
            num_scalar_prefetch=0,
            grid=(n_b, n_tc),
            in_specs=[
                pl.BlockSpec((batch_block, time_block, I),
                             lambda b, t: (b, t, 0)),            # x chunk (cast in-kernel)
                pl.BlockSpec((batch_block, Hp), lambda b, t: (b, 0)),  # h0 shard
                _vmem_resident(),                                # W_ih^T  (invariant)
                _vmem_resident(),                                # W_hh^T  (invariant)
                _vmem_resident(),                                # folded gi bias
                _vmem_resident(),                                # b_hn
            ],
            out_specs=pl.BlockSpec((batch_block, time_block, Hp),
                                   lambda b, t: (b, t, 0)),      # batch-first output
            scratch_shapes=[pltpu.VMEM((batch_block, Hp), jnp.float32)],
        ),
        out_shape=jax.ShapeDtypeStruct((B, T, Hp), out_dtype),
        compiler_params=pltpu.CompilerParams(
            dimension_semantics=("parallel", "arbitrary"),       # time is a true recurrence
            vmem_limit_bytes=vmem_limit_bytes),
    )(x, h0_p, wih_t, whh_t, bias_gi, bias_hn)

    output = out_p if Hp == H else out_p[:, :, :H]
    # Final hidden state == last per-step output (GRU); param dtype by default.
    h_n = output[:, T - 1, :][None, :, :]
    return output, h_n


def _gru_reference(x, h0, w_ih, w_hh, b_ih, b_hh):
    """Pure-JAX reference of torch GRU cell semantics (for verification)."""
    H = w_hh.shape[1]

    def step(h, x_t):
        gi = x_t @ w_ih.T + b_ih
        gh = h @ w_hh.T + b_hh
        i_r, i_z, i_n = gi[:, :H], gi[:, H:2 * H], gi[:, 2 * H:]
        h_r, h_z, h_n = gh[:, :H], gh[:, H:2 * H], gh[:, 2 * H:]
        r = jax.nn.sigmoid(i_r + h_r)
        z = jax.nn.sigmoid(i_z + h_z)
        n = jnp.tanh(i_n + r * h_n)
        h_new = (1.0 - z) * n + z * h
        return h_new, h_new

    h_last, outs = jax.lax.scan(step, h0[0], jnp.transpose(x, (1, 0, 2)))
    return jnp.transpose(outs, (1, 0, 2)), h_last[None]


if __name__ == "__main__":
    # Small shapes consistent with the module: batch=2, seq=8, input=16, hidden=32.
    B, T, I, H = 2, 8, 16, 32

    key = jax.random.PRNGKey(0)
    kx, k1, k2, k3, k4 = jax.random.split(key, 5)

    # Deterministic parameter init (torch uses U(-1/sqrt(H), 1/sqrt(H))).
    bound = 1.0 / jnp.sqrt(jnp.float32(H))
    x = jax.random.normal(kx, (B, T, I), dtype=jnp.float32)
    w_ih = jax.random.uniform(k1, (3 * H, I), jnp.float32, -bound, bound)
    w_hh = jax.random.uniform(k2, (3 * H, H), jnp.float32, -bound, bound)
    b_ih = jax.random.uniform(k3, (3 * H,), jnp.float32, -bound, bound)
    b_hh = jax.random.uniform(k4, (3 * H,), jnp.float32, -bound, bound)
    h0 = jnp.zeros((1, B, H), jnp.float32)       # forward(x, h=None) -> zero init

    ref_out, ref_hn = _gru_reference(x, h0, w_ih, w_hh, b_ih, b_hh)

    # Exact path (f32 matmul operands): strict check against the reference.
    out_f32, hn_f32 = rnn_encoder_forward(x, h0, w_ih, w_hh, b_ih, b_hh,
                                          matmul_dtype=jnp.float32)
    jax.block_until_ready((out_f32, hn_f32))
    assert out_f32.shape == (B, T, H) and hn_f32.shape == (1, B, H)
    assert jnp.allclose(out_f32, ref_out, atol=1e-5, rtol=1e-5)
    assert jnp.allclose(hn_f32, ref_hn, atol=1e-5, rtol=1e-5)

    # Default path (bf16 MXU operands, f32 accumulation / gate math).
    out_bf, hn_bf = rnn_encoder_forward(x, h0, w_ih, w_hh, b_ih, b_hh)
    jax.block_until_ready((out_bf, hn_bf))
    assert out_bf.dtype == w_hh.dtype and hn_bf.dtype == w_hh.dtype
    assert bool(jnp.all(jnp.isfinite(out_bf)))
    assert jnp.allclose(out_bf, ref_out, atol=5e-2, rtol=5e-2)
    assert jnp.allclose(hn_bf, ref_hn, atol=5e-2, rtol=5e-2)

    print("KERNEL_OK")
</pallas_src>

<mosaic_0001>
module attributes {stable_mosaic.version = 11 : i64} {
  func.func @_gru_fused_kernel(%arg0: i32, %arg1: i32, %arg2: memref<2x8x16xf32, #tpu.memory_space<vmem>>, %arg3: memref<2x128xf32, #tpu.memory_space<vmem>>, %arg4: memref<16x384xf32, #tpu.memory_space<vmem>>, %arg5: memref<128x384xf32, #tpu.memory_space<vmem>>, %arg6: memref<1x384xf32, #tpu.memory_space<vmem>>, %arg7: memref<1x128xf32, #tpu.memory_space<vmem>>, %arg8: memref<2x8x128xf32, #tpu.memory_space<vmem>>, %arg9: memref<2x128xf32, #tpu.memory_space<vmem>>) attributes {dimension_semantics = [#tpu.dimension_semantics<parallel>, #tpu.dimension_semantics<arbitrary>], iteration_bounds = array<i64: 1, 1>, scalar_prefetch = 0 : i64, scratch_operands = 1 : i64, tpu.core_type = #tpu.core_type<tc>, window_params = [{transform_indices = @transform_0, window_bounds = array<i64: 2, 8, 16>}, {transform_indices = @transform_1, window_bounds = array<i64: 2, 128>}, {pipeline_mode = #tpu.pipeline_mode<synchronous>, transform_indices = @transform_2, window_bounds = array<i64: 16, 384>}, {pipeline_mode = #tpu.pipeline_mode<synchronous>, transform_indices = @transform_3, window_bounds = array<i64: 128, 384>}, {pipeline_mode = #tpu.pipeline_mode<synchronous>, transform_indices = @transform_4, window_bounds = array<i64: 1, 384>}, {pipeline_mode = #tpu.pipeline_mode<synchronous>, transform_indices = @transform_5, window_bounds = array<i64: 1, 128>}, {transform_indices = @transform_6, window_bounds = array<i64: 2, 8, 128>}]} {
    %c0_i32 = arith.constant 0 : i32
    %0 = arith.cmpi eq, %arg1, %c0_i32 : i32
    %1 = arith.extui %0 : i1 to i32
    %c0_i32_0 = arith.constant 0 : i32
    %2 = arith.cmpi ne, %1, %c0_i32_0 : i32
    scf.if %2 {
      %c0_96 = arith.constant 0 : index
      %c0_97 = arith.constant 0 : index
      %313 = vector.load %arg3[%c0_96, %c0_97] : memref<2x128xf32, #tpu.memory_space<vmem>>, vector<2x128xf32>
      %c0_98 = arith.constant 0 : index
      %c0_99 = arith.constant 0 : index
      %314 = vector.load %arg9[%c0_98, %c0_99] : memref<2x128xf32, #tpu.memory_space<vmem>>, vector<2x128xf32>
      tpu.vector_store %arg9[%c0_98, %c0_99], %313 {strides = array<i32>} : memref<2x128xf32, #tpu.memory_space<vmem>>, vector<2x128xf32>,
    } else {
    }
    %c0 = arith.constant 0 : index
    %c0_1 = arith.constant 0 : index
    %c0_2 = arith.constant 0 : index
    %3 = vector.load %arg2[%c0, %c0_1, %c0_2] : memref<2x8x16xf32, #tpu.memory_space<vmem>>, vector<2x8x16xf32>
    %4 = vector.shape_cast %3 : vector<2x8x16xf32> to vector<16x16xf32>
    %c0_3 = arith.constant 0 : index
    %c0_4 = arith.constant 0 : index
    %5 = vector.load %arg4[%c0_3, %c0_4] : memref<16x384xf32, #tpu.memory_space<vmem>>, vector<16x384xf32>
    %cst = arith.constant dense<0.000000e+00> : vector<16x384xf32>
    %6 = tpu.matmul %4, %5, %cst {dimension_numbers = #tpu.dot_dimension_numbers<[1], [0], [0], [1], [0, 0, 1, 1], [], []>} : vector<16x16xf32>, vector<16x384xf32>, vector<16x384xf32> -> vector<16x384xf32>
    %c0_5 = arith.constant 0 : index
    %c0_6 = arith.constant 0 : index
    %7 = vector.load %arg6[%c0_5, %c0_6] : memref<1x384xf32, #tpu.memory_space<vmem>>, vector<1x384xf32>
    %8 = vector.broadcast %7 : vector<1x384xf32> to vector<16x384xf32>
    %9 = arith.addf %6, %8 : vector<16x384xf32>
    %10 = vector.shape_cast %9 : vector<16x384xf32> to vector<2x8x384xf32>
    %c0_7 = arith.constant 0 : index
    %c0_8 = arith.constant 0 : index
    %11 = vector.load %arg5[%c0_7, %c0_8] : memref<128x384xf32, #tpu.memory_space<vmem>>, vector<128x384xf32>
    %c0_9 = arith.constant 0 : index
    %c0_10 = arith.constant 0 : index
    %12 = vector.load %arg7[%c0_9, %c0_10] : memref<1x128xf32, #tpu.memory_space<vmem>>, vector<1x128xf32>
    %13 = vector.shape_cast %12 : vector<1x128xf32> to vector<1x128xf32>
    %14 = vector.broadcast %13 : vector<1x128xf32> to vector<2x128xf32>
    %c0_11 = arith.constant 0 : index
    %c0_12 = arith.constant 0 : index
    %15 = vector.load %arg9[%c0_11, %c0_12] : memref<2x128xf32, #tpu.memory_space<vmem>>, vector<2x128xf32>
    %16 = vector.extract_strided_slice %10 {offsets = [0, 0, 0], sizes = [2, 1, 384], strides = [1, 1, 1]} : vector<2x8x384xf32> to vector<2x1x384xf32>
    %17 = vector.shape_cast %16 : vector<2x1x384xf32> to vector<2x384xf32>
    %cst_13 = arith.constant dense<0.000000e+00> : vector<2x384xf32>
    %18 = tpu.matmul %15, %11, %cst_13 {dimension_numbers = #tpu.dot_dimension_numbers<[1], [0], [0], [1], [0, 0, 1, 1], [], []>} : vector<2x128xf32>, vector<128x384xf32>, vector<2x384xf32> -> vector<2x384xf32>
    %19 = vector.extract_strided_slice %17 {offsets = [0, 0], sizes = [2, 128], strides = [1, 1]} : vector<2x384xf32> to vector<2x128xf32>
    %20 = vector.extract_strided_slice %18 {offsets = [0, 0], sizes = [2, 128], strides = [1, 1]} : vector<2x384xf32> to vector<2x128xf32>
    %21 = arith.addf %19, %20 : vector<2x128xf32>
    %cst_14 = arith.constant 5.000000e-01 : f32
    %22 = vector.broadcast %cst_14 : f32 to vector<2x128xf32>
    %23 = arith.mulf %22, %21 : vector<2x128xf32>
    %24 = math.tanh %23 : vector<2x128xf32>
    %cst_15 = arith.constant 5.000000e-01 : f32
    %25 = vector.broadcast %cst_15 : f32 to vector<2x128xf32>
    %26 = arith.mulf %25, %24 : vector<2x128xf32>
    %cst_16 = arith.constant 5.000000e-01 : f32
    %27 = vector.broadcast %cst_16 : f32 to vector<2x128xf32>
    %28 = arith.addf %26, %27 : vector<2x128xf32>
    %29 = vector.extract_strided_slice %17 {offsets = [0, 128], sizes = [2, 128], strides = [1, 1]} : vector<2x384xf32> to vector<2x128xf32>
    %30 = vector.extract_strided_slice %18 {offsets = [0, 128], sizes = [2, 128], strides = [1, 1]} : vector<2x384xf32> to vector<2x128xf32>
    %31 = arith.addf %29, %30 : vector<2x128xf32>
    %cst_17 = arith.constant 5.000000e-01 : f32
    %32 = vector.broadcast %cst_17 : f32 to vector<2x128xf32>
    %33 = arith.mulf %32, %31 : vector<2x128xf32>
    %34 = math.tanh %33 : vector<2x128xf32>
    %cst_18 = arith.constant 5.000000e-01 : f32
    %35 = vector.broadcast %cst_18 : f32 to vector<2x128xf32>
    %36 = arith.mulf %35, %34 : vector<2x128xf32>
    %cst_19 = arith.constant 5.000000e-01 : f32
    %37 = vector.broadcast %cst_19 : f32 to vector<2x128xf32>
    %38 = arith.addf %36, %37 : vector<2x128xf32>
    %39 = vector.extract_strided_slice %17 {offsets = [0, 256], sizes = [2, 128], strides = [1, 1]} : vector<2x384xf32> to vector<2x128xf32>
    %40 = vector.extract_strided_slice %18 {offsets = [0, 256], sizes = [2, 128], strides = [1, 1]} : vector<2x384xf32> to vector<2x128xf32>
    %41 = arith.addf %40, %14 : vector<2x128xf32>
    %42 = arith.mulf %28, %41 : vector<2x128xf32>
    %43 = arith.addf %39, %42 : vector<2x128xf32>
    %44 = math.tanh %43 : vector<2x128xf32>
    %cst_20 = arith.constant 1.000000e+00 : f32
    %45 = vector.broadcast %cst_20 : f32 to vector<2x128xf32>
    %46 = arith.subf %45, %38 : vector<2x128xf32>
    %47 = arith.mulf %46, %44 : vector<2x128xf32>
    %48 = arith.mulf %38, %15 : vector<2x128xf32>
    %49 = arith.addf %47, %48 : vector<2x128xf32>
    %c0_21 = arith.constant 0 : index
    %c0_22 = arith.constant 0 : index
    %c0_23 = arith.constant 0 : index
    %50 = vector.load %arg8[%c0_21, %c0_22, %c0_23] : memref<2x8x128xf32, #tpu.memory_space<vmem>>, vector<2x1x128xf32>
    %51 = vector.shape_cast %50 : vector<2x1x128xf32> to vector<2x128xf32>
    %52 = vector.shape_cast %49 : vector<2x128xf32> to vector<2x1x128xf32>
    tpu.vector_store %arg8[%c0_21, %c0_22, %c0_23], %52 {strides = array<i32>} : memref<2x8x128xf32, #tpu.memory_space<vmem>>, vector<2x1x128xf32>,
    %53 = vector.extract_strided_slice %10 {offsets = [0, 1, 0], sizes = [2, 1, 384], strides = [1, 1, 1]} : vector<2x8x384xf32> to vector<2x1x384xf32>
    %54 = vector.shape_cast %53 : vector<2x1x384xf32> to vector<2x384xf32>
    %cst_24 = arith.constant dense<0.000000e+00> : vector<2x384xf32>
    %55 = tpu.matmul %49, %11, %cst_24 {dimension_numbers = #tpu.dot_dimension_numbers<[1], [0], [0], [1], [0, 0, 1, 1], [], []>} : vector<2x128xf32>, vector<128x384xf32>, vector<2x384xf32> -> vector<2x384xf32>
    %56 = vector.extract_strided_slice %54 {offsets = [0, 0], sizes = [2, 128], strides = [1, 1]} : vector<2x384xf32> to vector<2x128xf32>
    %57 = vector.extract_strided_slice %55 {offsets = [0, 0], sizes = [2, 128], strides = [1, 1]} : vector<2x384xf32> to vector<2x128xf32>
    %58 = arith.addf %56, %57 : vector<2x128xf32>
    %cst_25 = arith.constant 5.000000e-01 : f32
    %59 = vector.broadcast %cst_25 : f32 to vector<2x128xf32>
    %60 = arith.mulf %59, %58 : vector<2x128xf32>
    %61 = math.tanh %60 : vector<2x128xf32>
    %cst_26 = arith.constant 5.000000e-01 : f32
    %62 = vector.broadcast %cst_26 : f32 to vector<2x128xf32>
    %63 = arith.mulf %62, %61 : vector<2x128xf32>
    %cst_27 = arith.constant 5.000000e-01 : f32
    %64 = vector.broadcast %cst_27 : f32 to vector<2x128xf32>
    %65 = arith.addf %63, %64 : vector<2x128xf32>
    %66 = vector.extract_strided_slice %54 {offsets = [0, 128], sizes = [2, 128], strides = [1, 1]} : vector<2x384xf32> to vector<2x128xf32>
    %67 = vector.extract_strided_slice %55 {offsets = [0, 128], sizes = [2, 128], strides = [1, 1]} : vector<2x384xf32> to vector<2x128xf32>
    %68 = arith.addf %66, %67 : vector<2x128xf32>
    %cst_28 = arith.constant 5.000000e-01 : f32
    %69 = vector.broadcast %cst_28 : f32 to vector<2x128xf32>
    %70 = arith.mulf %69, %68 : vector<2x128xf32>
    %71 = math.tanh %70 : vector<2x128xf32>
    %cst_29 = arith.constant 5.000000e-01 : f32
    %72 = vector.broadcast %cst_29 : f32 to vector<2x128xf32>
    %73 = arith.mulf %72, %71 : vector<2x128xf32>
    %cst_30 = arith.constant 5.000000e-01 : f32
    %74 = vector.broadcast %cst_30 : f32 to vector<2x128xf32>
    %75 = arith.addf %73, %74 : vector<2x128xf32>
    %76 = vector.extract_strided_slice %54 {offsets = [0, 256], sizes = [2, 128], strides = [1, 1]} : vector<2x384xf32> to vector<2x128xf32>
    %77 = vector.extract_strided_slice %55 {offsets = [0, 256], sizes = [2, 128], strides = [1, 1]} : vector<2x384xf32> to vector<2x128xf32>
    %78 = arith.addf %77, %14 : vector<2x128xf32>
    %79 = arith.mulf %65, %78 : vector<2x128xf32>
    %80 = arith.addf %76, %79 : vector<2x128xf32>
    %81 = math.tanh %80 : vector<2x128xf32>
    %cst_31 = arith.constant 1.000000e+00 : f32
    %82 = vector.broadcast %cst_31 : f32 to vector<2x128xf32>
    %83 = arith.subf %82, %75 : vector<2x128xf32>
    %84 = arith.mulf %83, %81 : vector<2x128xf32>
    %85 = arith.mulf %75, %49 : vector<2x128xf32>
    %86 = arith.addf %84, %85 : vector<2x128xf32>
    %c0_32 = arith.constant 0 : index
    %c1 = arith.constant 1 : index
    %c0_33 = arith.constant 0 : index
    %87 = vector.load %arg8[%c0_32, %c1, %c0_33] : memref<2x8x128xf32, #tpu.memory_space<vmem>>, vector<2x1x128xf32>
    %88 = vector.shape_cast %87 : vector<2x1x128xf32> to vector<2x128xf32>
    %89 = vector.shape_cast %86 : vector<2x128xf32> to vector<2x1x128xf32>
    tpu.vector_store %arg8[%c0_32, %c1, %c0_33], %89 {strides = array<i32>} : memref<2x8x128xf32, #tpu.memory_space<vmem>>, vector<2x1x128xf32>,
    %90 = vector.extract_strided_slice %10 {offsets = [0, 2, 0], sizes = [2, 1, 384], strides = [1, 1, 1]} : vector<2x8x384xf32> to vector<2x1x384xf32>
    %91 = vector.shape_cast %90 : vector<2x1x384xf32> to vector<2x384xf32>
    %cst_34 = arith.constant dense<0.000000e+00> : vector<2x384xf32>
    %92 = tpu.matmul %86, %11, %cst_34 {dimension_numbers = #tpu.dot_dimension_numbers<[1], [0], [0], [1], [0, 0, 1, 1], [], []>} : vector<2x128xf32>, vector<128x384xf32>, vector<2x384xf32> -> vector<2x384xf32>
    %93 = vector.extract_strided_slice %91 {offsets = [0, 0], sizes = [2, 128], strides = [1, 1]} : vector<2x384xf32> to vector<2x128xf32>
    %94 = vector.extract_strided_slice %92 {offsets = [0, 0], sizes = [2, 128], strides = [1, 1]} : vector<2x384xf32> to vector<2x128xf32>
    %95 = arith.addf %93, %94 : vector<2x128xf32>
    %cst_35 = arith.constant 5.000000e-01 : f32
    %96 = vector.broadcast %cst_35 : f32 to vector<2x128xf32>
    %97 = arith.mulf %96, %95 : vector<2x128xf32>
    %98 = math.tanh %97 : vector<2x128xf32>
    %cst_36 = arith.constant 5.000000e-01 : f32
    %99 = vector.broadcast %cst_36 : f32 to vector<2x128xf32>
    %100 = arith.mulf %99, %98 : vector<2x128xf32>
    %cst_37 = arith.constant 5.000000e-01 : f32
    %101 = vector.broadcast %cst_37 : f32 to vector<2x128xf32>
    %102 = arith.addf %100, %101 : vector<2x128xf32>
    %103 = vector.extract_strided_slice %91 {offsets = [0, 128], sizes = [2, 128], strides = [1, 1]} : vector<2x384xf32> to vector<2x128xf32>
    %104 = vector.extract_strided_slice %92 {offsets = [0, 128], sizes = [2, 128], strides = [1, 1]} : vector<2x384xf32> to vector<2x128xf32>
    %105 = arith.addf %103, %104 : vector<2x128xf32>
    %cst_38 = arith.constant 5.000000e-01 : f32
    %106 = vector.broadcast %cst_38 : f32 to vector<2x128xf32>
    %107 = arith.mulf %106, %105 : vector<2x128xf32>
    %108 = math.tanh %107 : vector<2x128xf32>
    %cst_39 = arith.constant 5.000000e-01 : f32
    %109 = vector.broadcast %cst_39 : f32 to vector<2x128xf32>
    %110 = arith.mulf %109, %108 : vector<2x128xf32>
    %cst_40 = arith.constant 5.000000e-01 : f32
    %111 = vector.broadcast %cst_40 : f32 to vector<2x128xf32>
    %112 = arith.addf %110, %111 : vector<2x128xf32>
    %113 = vector.extract_strided_slice %91 {offsets = [0, 256], sizes = [2, 128], strides = [1, 1]} : vector<2x384xf32> to vector<2x128xf32>
    %114 = vector.extract_strided_slice %92 {offsets = [0, 256], sizes = [2, 128], strides = [1, 1]} : vector<2x384xf32> to vector<2x128xf32>
    %115 = arith.addf %114, %14 : vector<2x128xf32>
    %116 = arith.mulf %102, %115 : vector<2x128xf32>
    %117 = arith.addf %113, %116 : vector<2x128xf32>
    %118 = math.tanh %117 : vector<2x128xf32>
    %cst_41 = arith.constant 1.000000e+00 : f32
    %119 = vector.broadcast %cst_41 : f32 to vector<2x128xf32>
    %120 = arith.subf %119, %112 : vector<2x128xf32>
    %121 = arith.mulf %120, %118 : vector<2x128xf32>
    %122 = arith.mulf %112, %86 : vector<2x128xf32>
    %123 = arith.addf %121, %122 : vector<2x128xf32>
    %c0_42 = arith.constant 0 : index
    %c2 = arith.constant 2 : index
    %c0_43 = arith.constant 0 : index
    %124 = vector.load %arg8[%c0_42, %c2, %c0_43] : memref<2x8x128xf32, #tpu.memory_space<vmem>>, vector<2x1x128xf32>
    %125 = vector.shape_cast %124 : vector<2x1x128xf32> to vector<2x128xf32>
    %126 = vector.shape_cast %123 : vector<2x128xf32> to vector<2x1x128xf32>
    tpu.vector_store %arg8[%c0_42, %c2, %c0_43], %126 {strides = array<i32>} : memref<2x8x128xf32, #tpu.memory_space<vmem>>, vector<2x1x128xf32>,
    %127 = vector.extract_strided_slice %10 {offsets = [0, 3, 0], sizes = [2, 1, 384], strides = [1, 1, 1]} : vector<2x8x384xf32> to vector<2x1x384xf32>
    %128 = vector.shape_cast %127 : vector<2x1x384xf32> to vector<2x384xf32>
    %cst_44 = arith.constant dense<0.000000e+00> : vector<2x384xf32>
    %129 = tpu.matmul %123, %11, %cst_44 {dimension_numbers = #tpu.dot_dimension_numbers<[1], [0], [0], [1], [0, 0, 1, 1], [], []>} : vector<2x128xf32>, vector<128x384xf32>, vector<2x384xf32> -> vector<2x384xf32>
    %130 = vector.extract_strided_slice %128 {offsets = [0, 0], sizes = [2, 128], strides = [1, 1]} : vector<2x384xf32> to vector<2x128xf32>
    %131 = vector.extract_strided_slice %129 {offsets = [0, 0], sizes = [2, 128], strides = [1, 1]} : vector<2x384xf32> to vector<2x128xf32>
    %132 = arith.addf %130, %131 : vector<2x128xf32>
    %cst_45 = arith.constant 5.000000e-01 : f32
    %133 = vector.broadcast %cst_45 : f32 to vector<2x128xf32>
    %134 = arith.mulf %133, %132 : vector<2x128xf32>
    %135 = math.tanh %134 : vector<2x128xf32>
    %cst_46 = arith.constant 5.000000e-01 : f32
    %136 = vector.broadcast %cst_46 : f32 to vector<2x128xf32>
    %137 = arith.mulf %136, %135 : vector<2x128xf32>
    %cst_47 = arith.constant 5.000000e-01 : f32
    %138 = vector.broadcast %cst_47 : f32 to vector<2x128xf32>
    %139 = arith.addf %137, %138 : vector<2x128xf32>
    %140 = vector.extract_strided_slice %128 {offsets = [0, 128], sizes = [2, 128], strides = [1, 1]} : vector<2x384xf32> to vector<2x128xf32>
    %141 = vector.extract_strided_slice %129 {offsets = [0, 128], sizes = [2, 128], strides = [1, 1]} : vector<2x384xf32> to vector<2x128xf32>
    %142 = arith.addf %140, %141 : vector<2x128xf32>
    %cst_48 = arith.constant 5.000000e-01 : f32
    %143 = vector.broadcast %cst_48 : f32 to vector<2x128xf32>
    %144 = arith.mulf %143, %142 : vector<2x128xf32>
    %145 = math.tanh %144 : vector<2x128xf32>
    %cst_49 = arith.constant 5.000000e-01 : f32
    %146 = vector.broadcast %cst_49 : f32 to vector<2x128xf32>
    %147 = arith.mulf %146, %145 : vector<2x128xf32>
    %cst_50 = arith.constant 5.000000e-01 : f32
    %148 = vector.broadcast %cst_50 : f32 to vector<2x128xf32>
    %149 = arith.addf %147, %148 : vector<2x128xf32>
    %150 = vector.extract_strided_slice %128 {offsets = [0, 256], sizes = [2, 128], strides = [1, 1]} : vector<2x384xf32> to vector<2x128xf32>
    %151 = vector.extract_strided_slice %129 {offsets = [0, 256], sizes = [2, 128], strides = [1, 1]} : vector<2x384xf32> to vector<2x128xf32>
    %152 = arith.addf %151, %14 : vector<2x128xf32>
    %153 = arith.mulf %139, %152 : vector<2x128xf32>
    %154 = arith.addf %150, %153 : vector<2x128xf32>
    %155 = math.tanh %154 : vector<2x128xf32>
    %cst_51 = arith.constant 1.000000e+00 : f32
    %156 = vector.broadcast %cst_51 : f32 to vector<2x128xf32>
    %157 = arith.subf %156, %149 : vector<2x128xf32>
    %158 = arith.mulf %157, %155 : vector<2x128xf32>
    %159 = arith.mulf %149, %123 : vector<2x128xf32>
    %160 = arith.addf %158, %159 : vector<2x128xf32>
    %c0_52 = arith.constant 0 : index
    %c3 = arith.constant 3 : index
    %c0_53 = arith.constant 0 : index
    %161 = vector.load %arg8[%c0_52, %c3, %c0_53] : memref<2x8x128xf32, #tpu.memory_space<vmem>>, vector<2x1x128xf32>
    %162 = vector.shape_cast %161 : vector<2x1x128xf32> to vector<2x128xf32>
    %163 = vector.shape_cast %160 : vector<2x128xf32> to vector<2x1x128xf32>
    tpu.vector_store %arg8[%c0_52, %c3, %c0_53], %163 {strides = array<i32>} : memref<2x8x128xf32, #tpu.memory_space<vmem>>, vector<2x1x128xf32>,
    %164 = vector.extract_strided_slice %10 {offsets = [0, 4, 0], sizes = [2, 1, 384], strides = [1, 1, 1]} : vector<2x8x384xf32> to vector<2x1x384xf32>
    %165 = vector.shape_cast %164 : vector<2x1x384xf32> to vector<2x384xf32>
    %cst_54 = arith.constant dense<0.000000e+00> : vector<2x384xf32>
    %166 = tpu.matmul %160, %11, %cst_54 {dimension_numbers = #tpu.dot_dimension_numbers<[1], [0], [0], [1], [0, 0, 1, 1], [], []>} : vector<2x128xf32>, vector<128x384xf32>, vector<2x384xf32> -> vector<2x384xf32>
    %167 = vector.extract_strided_slice %165 {offsets = [0, 0], sizes = [2, 128], strides = [1, 1]} : vector<2x384xf32> to vector<2x128xf32>
    %168 = vector.extract_strided_slice %166 {offsets = [0, 0], sizes = [2, 128], strides = [1, 1]} : vector<2x384xf32> to vector<2x128xf32>
    %169 = arith.addf %167, %168 : vector<2x128xf32>
    %cst_55 = arith.constant 5.000000e-01 : f32
    %170 = vector.broadcast %cst_55 : f32 to vector<2x128xf32>
    %171 = arith.mulf %170, %169 : vector<2x128xf32>
    %172 = math.tanh %171 : vector<2x128xf32>
    %cst_56 = arith.constant 5.000000e-01 : f32
    %173 = vector.broadcast %cst_56 : f32 to vector<2x128xf32>
    %174 = arith.mulf %173, %172 : vector<2x128xf32>
    %cst_57 = arith.constant 5.000000e-01 : f32
    %175 = vector.broadcast %cst_57 : f32 to vector<2x128xf32>
    %176 = arith.addf %174, %175 : vector<2x128xf32>
    %177 = vector.extract_strided_slice %165 {offsets = [0, 128], sizes = [2, 128], strides = [1, 1]} : vector<2x384xf32> to vector<2x128xf32>
    %178 = vector.extract_strided_slice %166 {offsets = [0, 128], sizes = [2, 128], strides = [1, 1]} : vector<2x384xf32> to vector<2x128xf32>
    %179 = arith.addf %177, %178 : vector<2x128xf32>
    %cst_58 = arith.constant 5.000000e-01 : f32
    %180 = vector.broadcast %cst_58 : f32 to vector<2x128xf32>
    %181 = arith.mulf %180, %179 : vector<2x128xf32>
    %182 = math.tanh %181 : vector<2x128xf32>
    %cst_59 = arith.constant 5.000000e-01 : f32
    %183 = vector.broadcast %cst_59 : f32 to vector<2x128xf32>
    %184 = arith.mulf %183, %182 : vector<2x128xf32>
    %cst_60 = arith.constant 5.000000e-01 : f32
    %185 = vector.broadcast %cst_60 : f32 to vector<2x128xf32>
    %186 = arith.addf %184, %185 : vector<2x128xf32>
    %187 = vector.extract_strided_slice %165 {offsets = [0, 256], sizes = [2, 128], strides = [1, 1]} : vector<2x384xf32> to vector<2x128xf32>
    %188 = vector.extract_strided_slice %166 {offsets = [0, 256], sizes = [2, 128], strides = [1, 1]} : vector<2x384xf32> to vector<2x128xf32>
    %189 = arith.addf %188, %14 : vector<2x128xf32>
    %190 = arith.mulf %176, %189 : vector<2x128xf32>
    %191 = arith.addf %187, %190 : vector<2x128xf32>
    %192 = math.tanh %191 : vector<2x128xf32>
    %cst_61 = arith.constant 1.000000e+00 : f32
    %193 = vector.broadcast %cst_61 : f32 to vector<2x128xf32>
    %194 = arith.subf %193, %186 : vector<2x128xf32>
    %195 = arith.mulf %194, %192 : vector<2x128xf32>
    %196 = arith.mulf %186, %160 : vector<2x128xf32>
    %197 = arith.addf %195, %196 : vector<2x128xf32>
    %c0_62 = arith.constant 0 : index
    %c4 = arith.constant 4 : index
    %c0_63 = arith.constant 0 : index
    %198 = vector.load %arg8[%c0_62, %c4, %c0_63] : memref<2x8x128xf32, #tpu.memory_space<vmem>>, vector<2x1x128xf32>
    %199 = vector.shape_cast %198 : vector<2x1x128xf32> to vector<2x128xf32>
    %200 = vector.shape_cast %197 : vector<2x128xf32> to vector<2x1x128xf32>
    tpu.vector_store %arg8[%c0_62, %c4, %c0_63], %200 {strides = array<i32>} : memref<2x8x128xf32, #tpu.memory_space<vmem>>, vector<2x1x128xf32>,
    %201 = vector.extract_strided_slice %10 {offsets = [0, 5, 0], sizes = [2, 1, 384], strides = [1, 1, 1]} : vector<2x8x384xf32> to vector<2x1x384xf32>
    %202 = vector.shape_cast %201 : vector<2x1x384xf32> to vector<2x384xf32>
    %cst_64 = arith.constant dense<0.000000e+00> : vector<2x384xf32>
    %203 = tpu.matmul %197, %11, %cst_64 {dimension_numbers = #tpu.dot_dimension_numbers<[1], [0], [0], [1], [0, 0, 1, 1], [], []>} : vector<2x128xf32>, vector<128x384xf32>, vector<2x384xf32> -> vector<2x384xf32>
    %204 = vector.extract_strided_slice %202 {offsets = [0, 0], sizes = [2, 128], strides = [1, 1]} : vector<2x384xf32> to vector<2x128xf32>
    %205 = vector.extract_strided_slice %203 {offsets = [0, 0], sizes = [2, 128], strides = [1, 1]} : vector<2x384xf32> to vector<2x128xf32>
    %206 = arith.addf %204, %205 : vector<2x128xf32>
    %cst_65 = arith.constant 5.000000e-01 : f32
    %207 = vector.broadcast %cst_65 : f32 to vector<2x128xf32>
    %208 = arith.mulf %207, %206 : vector<2x128xf32>
    %209 = math.tanh %208 : vector<2x128xf32>
    %cst_66 = arith.constant 5.000000e-01 : f32
    %210 = vector.broadcast %cst_66 : f32 to vector<2x128xf32>
    %211 = arith.mulf %210, %209 : vector<2x128xf32>
    %cst_67 = arith.constant 5.000000e-01 : f32
    %212 = vector.broadcast %cst_67 : f32 to vector<2x128xf32>
    %213 = arith.addf %211, %212 : vector<2x128xf32>
    %214 = vector.extract_strided_slice %202 {offsets = [0, 128], sizes = [2, 128], strides = [1, 1]} : vector<2x384xf32> to vector<2x128xf32>
    %215 = vector.extract_strided_slice %203 {offsets = [0, 128], sizes = [2, 128], strides = [1, 1]} : vector<2x384xf32> to vector<2x128xf32>
    %216 = arith.addf %214, %215 : vector<2x128xf32>
    %cst_68 = arith.constant 5.000000e-01 : f32
    %217 = vector.broadcast %cst_68 : f32 to vector<2x128xf32>
    %218 = arith.mulf %217, %216 : vector<2x128xf32>
    %219 = math.tanh %218 : vector<2x128xf32>
    %cst_69 = arith.constant 5.000000e-01 : f32
    %220 = vector.broadcast %cst_69 : f32 to vector<2x128xf32>
    %221 = arith.mulf %220, %219 : vector<2x128xf32>
    %cst_70 = arith.constant 5.000000e-01 : f32
    %222 = vector.broadcast %cst_70 : f32 to vector<2x128xf32>
    %223 = arith.addf %221, %222 : vector<2x128xf32>
    %224 = vector.extract_strided_slice %202 {offsets = [0, 256], sizes = [2, 128], strides = [1, 1]} : vector<2x384xf32> to vector<2x128xf32>
    %225 = vector.extract_strided_slice %203 {offsets = [0, 256], sizes = [2, 128], strides = [1, 1]} : vector<2x384xf32> to vector<2x128xf32>
    %226 = arith.addf %225, %14 : vector<2x128xf32>
    %227 = arith.mulf %213, %226 : vector<2x128xf32>
    %228 = arith.addf %224, %227 : vector<2x128xf32>
    %229 = math.tanh %228 : vector<2x128xf32>
    %cst_71 = arith.constant 1.000000e+00 : f32
    %230 = vector.broadcast %cst_71 : f32 to vector<2x128xf32>
    %231 = arith.subf %230, %223 : vector<2x128xf32>
    %232 = arith.mulf %231, %229 : vector<2x128xf32>
    %233 = arith.mulf %223, %197 : vector<2x128xf32>
    %234 = arith.addf %232, %233 : vector<2x128xf32>
    %c0_72 = arith.constant 0 : index
    %c5 = arith.constant 5 : index
    %c0_73 = arith.constant 0 : index
    %235 = vector.load %arg8[%c0_72, %c5, %c0_73] : memref<2x8x128xf32, #tpu.memory_space<vmem>>, vector<2x1x128xf32>
    %236 = vector.shape_cast %235 : vector<2x1x128xf32> to vector<2x128xf32>
    %237 = vector.shape_cast %234 : vector<2x128xf32> to vector<2x1x128xf32>
    tpu.vector_store %arg8[%c0_72, %c5, %c0_73], %237 {strides = array<i32>} : memref<2x8x128xf32, #tpu.memory_space<vmem>>, vector<2x1x128xf32>,
    %238 = vector.extract_strided_slice %10 {offsets = [0, 6, 0], sizes = [2, 1, 384], strides = [1, 1, 1]} : vector<2x8x384xf32> to vector<2x1x384xf32>
    %239 = vector.shape_cast %238 : vector<2x1x384xf32> to vector<2x384xf32>
    %cst_74 = arith.constant dense<0.000000e+00> : vector<2x384xf32>
    %240 = tpu.matmul %234, %11, %cst_74 {dimension_numbers = #tpu.dot_dimension_numbers<[1], [0], [0], [1], [0, 0, 1, 1], [], []>} : vector<2x128xf32>, vector<128x384xf32>, vector<2x384xf32> -> vector<2x384xf32>
    %241 = vector.extract_strided_slice %239 {offsets = [0, 0], sizes = [2, 128], strides = [1, 1]} : vector<2x384xf32> to vector<2x128xf32>
    %242 = vector.extract_strided_slice %240 {offsets = [0, 0], sizes = [2, 128], strides = [1, 1]} : vector<2x384xf32> to vector<2x128xf32>
    %243 = arith.addf %241, %242 : vector<2x128xf32>
    %cst_75 = arith.constant 5.000000e-01 : f32
    %244 = vector.broadcast %cst_75 : f32 to vector<2x128xf32>
    %245 = arith.mulf %244, %243 : vector<2x128xf32>
    %246 = math.tanh %245 : vector<2x128xf32>
    %cst_76 = arith.constant 5.000000e-01 : f32
    %247 = vector.broadcast %cst_76 : f32 to vector<2x128xf32>
    %248 = arith.mulf %247, %246 : vector<2x128xf32>
    %cst_77 = arith.constant 5.000000e-01 : f32
    %249 = vector.broadcast %cst_77 : f32 to vector<2x128xf32>
    %250 = arith.addf %248, %249 : vector<2x128xf32>
    %251 = vector.extract_strided_slice %239 {offsets = [0, 128], sizes = [2, 128], strides = [1, 1]} : vector<2x384xf32> to vector<2x128xf32>
    %252 = vector.extract_strided_slice %240 {offsets = [0, 128], sizes = [2, 128], strides = [1, 1]} : vector<2x384xf32> to vector<2x128xf32>
    %253 = arith.addf %251, %252 : vector<2x128xf32>
    %cst_78 = arith.constant 5.000000e-01 : f32
    %254 = vector.broadcast %cst_78 : f32 to vector<2x128xf32>
    %255 = arith.mulf %254, %253 : vector<2x128xf32>
    %256 = math.tanh %255 : vector<2x128xf32>
    %cst_79 = arith.constant 5.000000e-01 : f32
    %257 = vector.broadcast %cst_79 : f32 to vector<2x128xf32>
    %258 = arith.mulf %257, %256 : vector<2x128xf32>
    %cst_80 = arith.constant 5.000000e-01 : f32
    %259 = vector.broadcast %cst_80 : f32 to vector<2x128xf32>
    %260 = arith.addf %258, %259 : vector<2x128xf32>
    %261 = vector.extract_strided_slice %239 {offsets = [0, 256], sizes = [2, 128], strides = [1, 1]} : vector<2x384xf32> to vector<2x128xf32>
    %262 = vector.extract_strided_slice %240 {offsets = [0, 256], sizes = [2, 128], strides = [1, 1]} : vector<2x384xf32> to vector<2x128xf32>
    %263 = arith.addf %262, %14 : vector<2x128xf32>
    %264 = arith.mulf %250, %263 : vector<2x128xf32>
    %265 = arith.addf %261, %264 : vector<2x128xf32>
    %266 = math.tanh %265 : vector<2x128xf32>
    %cst_81 = arith.constant 1.000000e+00 : f32
    %267 = vector.broadcast %cst_81 : f32 to vector<2x128xf32>
    %268 = arith.subf %267, %260 : vector<2x128xf32>
    %269 = arith.mulf %268, %266 : vector<2x128xf32>
    %270 = arith.mulf %260, %234 : vector<2x128xf32>
    %271 = arith.addf %269, %270 : vector<2x128xf32>
    %c0_82 = arith.constant 0 : index
    %c6 = arith.constant 6 : index
    %c0_83 = arith.constant 0 : index
    %272 = vector.load %arg8[%c0_82, %c6, %c0_83] : memref<2x8x128xf32, #tpu.memory_space<vmem>>, vector<2x1x128xf32>
    %273 = vector.shape_cast %272 : vector<2x1x128xf32> to vector<2x128xf32>
    %274 = vector.shape_cast %271 : vector<2x128xf32> to vector<2x1x128xf32>
    tpu.vector_store %arg8[%c0_82, %c6, %c0_83], %274 {strides = array<i32>} : memref<2x8x128xf32, #tpu.memory_space<vmem>>, vector<2x1x128xf32>,
    %275 = vector.extract_strided_slice %10 {offsets = [0, 7, 0], sizes = [2, 1, 384], strides = [1, 1, 1]} : vector<2x8x384xf32> to vector<2x1x384xf32>
    %276 = vector.shape_cast %275 : vector<2x1x384xf32> to vector<2x384xf32>
    %cst_84 = arith.constant dense<0.000000e+00> : vector<2x384xf32>
    %277 = tpu.matmul %271, %11, %cst_84 {dimension_numbers = #tpu.dot_dimension_numbers<[1], [0], [0], [1], [0, 0, 1, 1], [], []>} : vector<2x128xf32>, vector<128x384xf32>, vector<2x384xf32> -> vector<2x384xf32>
    %278 = vector.extract_strided_slice %276 {offsets = [0, 0], sizes = [2, 128], strides = [1, 1]} : vector<2x384xf32> to vector<2x128xf32>
    %279 = vector.extract_strided_slice %277 {offsets = [0, 0], sizes = [2, 128], strides = [1, 1]} : vector<2x384xf32> to vector<2x128xf32>
    %280 = arith.addf %278, %279 : vector<2x128xf32>
    %cst_85 = arith.constant 5.000000e-01 : f32
    %281 = vector.broadcast %cst_85 : f32 to vector<2x128xf32>
    %282 = arith.mulf %281, %280 : vector<2x128xf32>
    %283 = math.tanh %282 : vector<2x128xf32>
    %cst_86 = arith.constant 5.000000e-01 : f32
    %284 = vector.broadcast %cst_86 : f32 to vector<2x128xf32>
    %285 = arith.mulf %284, %283 : vector<2x128xf32>
    %cst_87 = arith.constant 5.000000e-01 : f32
    %286 = vector.broadcast %cst_87 : f32 to vector<2x128xf32>
    %287 = arith.addf %285, %286 : vector<2x128xf32>
    %288 = vector.extract_strided_slice %276 {offsets = [0, 128], sizes = [2, 128], strides = [1, 1]} : vector<2x384xf32> to vector<2x128xf32>
    %289 = vector.extract_strided_slice %277 {offsets = [0, 128], sizes = [2, 128], strides = [1, 1]} : vector<2x384xf32> to vector<2x128xf32>
    %290 = arith.addf %288, %289 : vector<2x128xf32>
    %cst_88 = arith.constant 5.000000e-01 : f32
    %291 = vector.broadcast %cst_88 : f32 to vector<2x128xf32>
    %292 = arith.mulf %291, %290 : vector<2x128xf32>
    %293 = math.tanh %292 : vector<2x128xf32>
    %cst_89 = arith.constant 5.000000e-01 : f32
    %294 = vector.broadcast %cst_89 : f32 to vector<2x128xf32>
    %295 = arith.mulf %294, %293 : vector<2x128xf32>
    %cst_90 = arith.constant 5.000000e-01 : f32
    %296 = vector.broadcast %cst_90 : f32 to vector<2x128xf32>
    %297 = arith.addf %295, %296 : vector<2x128xf32>
    %298 = vector.extract_strided_slice %276 {offsets = [0, 256], sizes = [2, 128], strides = [1, 1]} : vector<2x384xf32> to vector<2x128xf32>
    %299 = vector.extract_strided_slice %277 {offsets = [0, 256], sizes = [2, 128], strides = [1, 1]} : vector<2x384xf32> to vector<2x128xf32>
    %300 = arith.addf %299, %14 : vector<2x128xf32>
    %301 = arith.mulf %287, %300 : vector<2x128xf32>
    %302 = arith.addf %298, %301 : vector<2x128xf32>
    %303 = math.tanh %302 : vector<2x128xf32>
    %cst_91 = arith.constant 1.000000e+00 : f32
    %304 = vector.broadcast %cst_91 : f32 to vector<2x128xf32>
    %305 = arith.subf %304, %297 : vector<2x128xf32>
    %306 = arith.mulf %305, %303 : vector<2x128xf32>
    %307 = arith.mulf %297, %271 : vector<2x128xf32>
    %308 = arith.addf %306, %307 : vector<2x128xf32>
    %c0_92 = arith.constant 0 : index
    %c7 = arith.constant 7 : index
    %c0_93 = arith.constant 0 : index
    %309 = vector.load %arg8[%c0_92, %c7, %c0_93] : memref<2x8x128xf32, #tpu.memory_space<vmem>>, vector<2x1x128xf32>
    %310 = vector.shape_cast %309 : vector<2x1x128xf32> to vector<2x128xf32>
    %311 = vector.shape_cast %308 : vector<2x128xf32> to vector<2x1x128xf32>
    tpu.vector_store %arg8[%c0_92, %c7, %c0_93], %311 {strides = array<i32>} : memref<2x8x128xf32, #tpu.memory_space<vmem>>, vector<2x1x128xf32>,
    %c0_94 = arith.constant 0 : index
    %c0_95 = arith.constant 0 : index
    %312 = vector.load %arg9[%c0_94, %c0_95] : memref<2x128xf32, #tpu.memory_space<vmem>>, vector<2x128xf32>
    tpu.vector_store %arg9[%c0_94, %c0_95], %308 {strides = array<i32>} : memref<2x128xf32, #tpu.memory_space<vmem>>, vector<2x128xf32>,
    return
  }
  func.func @transform_0(%arg0: i32, %arg1: i32) -> (i32, i32, i32) {
    %c0_i32 = arith.constant 0 : i32
    %c0_i32_0 = arith.constant 0 : i32
    return %arg0, %arg1, %c0_i32 : i32, i32, i32
  }
  func.func @transform_1(%arg0: i32, %arg1: i32) -> (i32, i32) {
    %c0_i32 = arith.constant 0 : i32
    %c0_i32_0 = arith.constant 0 : i32
    return %arg0, %c0_i32 : i32, i32
  }
  func.func @transform_2(%arg0: i32, %arg1: i32) -> (i32, i32) {
    %c0_i32 = arith.constant 0 : i32
    %c0_i32_0 = arith.constant 0 : i32
    %c0_i32_1 = arith.constant 0 : i32
    return %c0_i32, %c0_i32_0 : i32, i32
  }
  func.func @transform_3(%arg0: i32, %arg1: i32) -> (i32, i32) {
    %c0_i32 = arith.constant 0 : i32
    %c0_i32_0 = arith.constant 0 : i32
    %c0_i32_1 = arith.constant 0 : i32
    return %c0_i32, %c0_i32_0 : i32, i32
  }
  func.func @transform_4(%arg0: i32, %arg1: i32) -> (i32, i32) {
    %c0_i32 = arith.constant 0 : i32
    %c0_i32_0 = arith.constant 0 : i32
    %c0_i32_1 = arith.constant 0 : i32
    return %c0_i32, %c0_i32_0 : i32, i32
  }
  func.func @transform_5(%arg0: i32, %arg1: i32) -> (i32, i32) {
    %c0_i32 = arith.constant 0 : i32
    %c0_i32_0 = arith.constant 0 : i32
    %c0_i32_1 = arith.constant 0 : i32
    return %c0_i32, %c0_i32_0 : i32, i32
  }
  func.func @transform_6(%arg0: i32, %arg1: i32) -> (i32, i32, i32) {
    %c0_i32 = arith.constant 0 : i32
    %c0_i32_0 = arith.constant 0 : i32
    return %arg0, %arg1, %c0_i32 : i32, i32, i32
  }
}

</mosaic_0001>

<llo_original>
// kernel: rnn_encoder_forward.1
$region0: #{rnn_encoder_forward.1}
  #allocation0 [shape = 'u32[]', space=smem, size = 0x4, offset = 0x4, fixed_abs, tag = 'smem constant byte address 0x4 - core index']
  #allocation1 [shape = 'u32[144,128]{1,0:T(1,128)}', space=vmem, size = 0x12000, scoped, tag = 'internal scratch']
  #allocation2 [shape = 'f32[2,128]{1,0:T(2,128)}', space=vmem, size = 0x400, scoped, tag = 'scratch operand']
  %s0 = inlined_call_operand.vmem [shape: f32[2,8,16], index: 0, kind: input, shape index: {}]
  %s1 = inlined_call_operand.vmem [shape: f32[2,128], index: 1, kind: input, shape index: {}]
  %s2 = inlined_call_operand.vmem [shape: f32[16,384], index: 2, kind: input, shape index: {}]
  %s3 = inlined_call_operand.vmem [shape: f32[128,384], index: 3, kind: input, shape index: {}]
  %s4 = inlined_call_operand.vmem [shape: f32[1,384], index: 4, kind: input, shape index: {}]
  %s5 = inlined_call_operand.vmem [shape: f32[1,128], index: 5, kind: input, shape index: {}]
  %s6 = inlined_call_operand.vmem [shape: f32[2,8,128], index: 6, kind: output, shape index: {}]
  %s7 = sld [smem:[#allocation0]]
  $region38: #{rnn_encoder_forward.1} parent=0
    _
  %s9 = ssub.s32 1, %s7
  %s10 = scalar_select 0, %s9, %s7
  // Predicated region
  $region2: #{rnn_encoder_forward.1} parent=0 // pred_check
    _
  $region3: #{rnn_encoder_forward.1} parent=0 // pred_check_branch
    %12 = sbr.rel (0) target = $region5
  $region4: #{rnn_encoder_forward.1} parent=0 // pred_region
    _
  $region5: #{rnn_encoder_forward.1} parent=0 // pred_fallthru
    _
  // Predicated region
  $region6: #{rnn_encoder_forward.1} parent=0 // pred_check
    _
  $region7: #{rnn_encoder_forward.1} parent=0 // pred_check_branch
    %14 = sbr.rel (0) target = $region9
  $region8: #{rnn_encoder_forward.1} parent=0 // pred_region
    _
  $region9: #{rnn_encoder_forward.1} parent=0 // pred_fallthru
    _
  // Predicated region
  $region10: #{rnn_encoder_forward.1} parent=0 // pred_check
    _
  $region11: #{rnn_encoder_forward.1} parent=0 // pred_check_branch
    %16 = sbr.rel (0) target = $region13
  $region12: #{rnn_encoder_forward.1} parent=0 // pred_region
    _
  $region13: #{rnn_encoder_forward.1} parent=0 // pred_fallthru
    _
  // Predicated region
  $region14: #{rnn_encoder_forward.1} parent=0 // pred_check
    _
  $region15: #{rnn_encoder_forward.1} parent=0 // pred_check_branch
    %18 = sbr.rel (0) target = $region17
  $region16: #{rnn_encoder_forward.1} parent=0 // pred_region
    _
  $region17: #{rnn_encoder_forward.1} parent=0 // pred_fallthru
    _
  // Predicated region
  $region18: #{rnn_encoder_forward.1} parent=0 // pred_check
    _
  $region19: #{rnn_encoder_forward.1} parent=0 // pred_check_branch
    %20 = sbr.rel (0) target = $region21
  $region20: #{rnn_encoder_forward.1} parent=0 // pred_region
    _
  $region21: #{rnn_encoder_forward.1} parent=0 // pred_fallthru
    _
  // Predicated region
  $region22: #{rnn_encoder_forward.1} parent=0 // pred_check
    _
  $region23: #{rnn_encoder_forward.1} parent=0 // pred_check_branch
    %22 = sbr.rel (0) target = $region25
  $region24: #{rnn_encoder_forward.1} parent=0 // pred_region
    _
  $region25: #{rnn_encoder_forward.1} parent=0 // pred_fallthru
    _
  %p23 = scmp.eq.s32.totalorder 0, 0
  // Predicated region
  $region26: #{rnn_encoder_forward.1} parent=0 // pred_check
    %p24 = pneg %p23
  $region27: #{rnn_encoder_forward.1} parent=0 // pred_check_branch
    %26 = sbr.rel (%p24) target = $region29
  $region28: #{rnn_encoder_forward.1} parent=0 // pred_region
    %v27 = vld [vmem:[%s1] sm:$0x3]
    %28 = vst [vmem:[#allocation2] sm:$0x3] %v27
  $region29: #{rnn_encoder_forward.1} parent=0 // pred_fallthru
    _
  %v29 = vld [vmem:[%s0] sm:$0xff]
  %v30 = vld [vmem:[%s0 + $0x8] sm:$0xff]
  %v31 = vld [vmem:[%s2] sm:$0xff]
  %v32 = vld [vmem:[%s2 + $0x8] sm:$0xff]
  %v33 = vld [vmem:[%s2 + $0x10] sm:$0xff]
  %v34 = vld [vmem:[%s2 + $0x18] sm:$0xff]
  %v35 = vld [vmem:[%s2 + $0x20] sm:$0xff]
  %v36 = vld [vmem:[%s2 + $0x28] sm:$0xff]
  %v37 = vld [vmem:[%s4] sm:$0x7]
  %v39 = vlaneseq
  %v40 = vshrl.u32 %v39, 7
  %v41 = vsub.s32 0, %v40
  %v42 = vrot.slane %v37, %v41
  %v43 = vlaneseq
  %v44 = vshrl.u32 %v43, 7
  %v45 = vsub.s32 1, %v44
  %v46 = vrot.slane %v37, %v45
  %v47 = vlaneseq
  %v48 = vshrl.u32 %v47, 7
  %v49 = vsub.s32 2, %v48
  %v50 = vrot.slane %v37, %v49
  %vm54 = vcmask 130048
  %v56 = vsel %vm54, %v29, 0
  %v59 = vsel %vm54, %v30, 0
  %61 = vmatprep.subr.mxu0 0.0
  %62 = vmatpush1.msra.mxu0 0.0
  %63 = vmatprep.subr.mxu0 0.0
  %64 = vmatpush1.msra.mxu0 0.0
  %65 = vmatprep.subr.mxu0 0.0
  %66 = vmatpush1.msra.mxu0 0.0
  %67 = vmatprep.subr.mxu0 0.0
  %68 = vmatpush1.msra.mxu0 0.0
  %69 = vmatprep.subr.mxu0 0.0
  %70 = vmatpush1.msra.mxu0 0.0
  %71 = vmatprep.subr.mxu0 0.0
  %72 = vmatpush1.msra.mxu0 0.0
  %73 = vmatprep.subr.mxu0 0.0
  %74 = vmatpush1.msra.mxu0 0.0
  %75 = vmatprep.subr.mxu0 0.0
  %76 = vmatpush1.msra.mxu0 0.0
  %77 = vmatprep.subr.mxu0 0.0
  %78 = vmatpush1.msra.mxu0 0.0
  %79 = vmatprep.subr.mxu0 0.0
  %80 = vmatpush1.msra.mxu0 0.0
  %81 = vmatprep.subr.mxu0 0.0
  %82 = vmatpush1.msra.mxu0 0.0
  %83 = vmatprep.subr.mxu0 0.0
  %84 = vmatpush1.msra.mxu0 0.0
  %85 = vmatprep.subr.mxu0 0.0
  %86 = vmatpush1.msra.mxu0 0.0
  %87 = vmatprep.subr.mxu0 0.0
  %88 = vmatpush1.msra.mxu0 0.0
  %89 = vmatprep.subr.mxu0 %v35
  %90 = vmatpush1.msra.mxu0 %v34
  %91 = vmatprep.subr.mxu0 %v32
  %92 = vmatpush1.msra.mxu0 %v31
  %93 = vmatprep.subr.mxu0 0.0
  %94 = vmatpush2.msra.mxu0 0.0
  %95 = vmatprep.subr.mxu0 0.0
  %96 = vmatpush2.msra.mxu0 0.0
  %97 = vmatprep.subr.mxu0 0.0
  %98 = vmatpush2.msra.mxu0 0.0
  %99 = vmatprep.subr.mxu0 0.0
  %100 = vmatpush2.msra.mxu0 0.0
  %101 = vmatprep.subr.mxu0 0.0
  %102 = vmatpush2.msra.mxu0 0.0
  %103 = vmatprep.subr.mxu0 0.0
  %104 = vmatpush2.msra.mxu0 0.0
  %105 = vmatprep.subr.mxu0 0.0
  %106 = vmatpush2.msra.mxu0 0.0
  %107 = vmatprep.subr.mxu0 0.0
  %108 = vmatpush2.msra.mxu0 0.0
  %109 = vmatprep.subr.mxu0 0.0
  %110 = vmatpush2.msra.mxu0 0.0
  %111 = vmatprep.subr.mxu0 0.0
  %112 = vmatpush2.msra.mxu0 0.0
  %113 = vmatprep.subr.mxu0 0.0
  %114 = vmatpush2.msra.mxu0 0.0
  %115 = vmatprep.subr.mxu0 0.0
  %116 = vmatpush2.msra.mxu0 0.0
  %117 = vmatprep.subr.mxu0 0.0
  %118 = vmatpush2.msra.mxu0 0.0
  %119 = vmatprep.subr.mxu0 0.0
  %120 = vmatpush2.msra.mxu0 0.0
  %121 = vmatprep.subr.mxu0 0.0
  %122 = vmatpush2.msra.mxu0 0.0
  %123 = vmatprep.subr.mxu0 0.0
  %124 = vmatpush2.msra.mxu0 0.0
  %125 = vmatprep.mubr.f32.mxu0 0.0
  %126 = vmatmul.mubr.f32.gmra.mxu0 %v56
  %v127 = vpop.f32.mrf.mxu0
  %v128 = vadd.f32 %v42, %v127
  %v129 = vpop.f32.mrf.mxu0
  %v130 = vadd.f32 %v46, %v129
  %131 = vmatprep.mubr.f32.mxu0 0.0
  %132 = vmatmul.mubr.f32.gmra.mxu0 %v59
  %v133 = vpop.f32.mrf.mxu0
  %v134 = vadd.f32 %v42, %v133
  %v135 = vpop.f32.mrf.mxu0
  %v136 = vadd.f32 %v46, %v135
  %137 = vdwg.mxu0
  %138 = vmatprep.subr.mxu0 0.0
  %139 = vmatpush1.msra.mxu0 0.0
  %140 = vmatprep.subr.mxu0 0.0
  %141 = vmatpush1.msra.mxu0 0.0
  %142 = vmatprep.subr.mxu0 0.0
  %143 = vmatpush1.msra.mxu0 0.0
  %144 = vmatprep.subr.mxu0 0.0
  %145 = vmatpush1.msra.mxu0 0.0
  %146 = vmatprep.subr.mxu0 0.0
  %147 = vmatpush1.msra.mxu0 0.0
  %148 = vmatprep.subr.mxu0 0.0
  %149 = vmatpush1.msra.mxu0 0.0
  %150 = vmatprep.subr.mxu0 0.0
  %151 = vmatpush1.msra.mxu0 0.0
  %152 = vmatprep.subr.mxu0 0.0
  %153 = vmatpush1.msra.mxu0 0.0
  %154 = vmatprep.subr.mxu0 0.0
  %155 = vmatpush1.msra.mxu0 0.0
  %156 = vmatprep.subr.mxu0 0.0
  %157 = vmatpush1.msra.mxu0 0.0
  %158 = vmatprep.subr.mxu0 0.0
  %159 = vmatpush1.msra.mxu0 0.0
  %160 = vmatprep.subr.mxu0 0.0
  %161 = vmatpush1.msra.mxu0 0.0
  %162 = vmatprep.subr.mxu0 0.0
  %163 = vmatpush1.msra.mxu0 0.0
  %164 = vmatprep.subr.mxu0 0.0
  %165 = vmatpush1.msra.mxu0 0.0
  %166 = vmatprep.subr.mxu0 0.0
  %167 = vmatpush1.msra.mxu0 %v36
  %168 = vmatprep.subr.mxu0 0.0
  %169 = vmatpush1.msra.mxu0 %v33
  %170 = vmatprep.subr.mxu0 0.0
  %171 = vmatpush2.msra.mxu0 0.0
  %172 = vmatprep.subr.mxu0 0.0
  %173 = vmatpush2.msra.mxu0 0.0
  %174 = vmatprep.subr.mxu0 0.0
  %175 = vmatpush2.msra.mxu0 0.0
  %176 = vmatprep.subr.mxu0 0.0
  %177 = vmatpush2.msra.mxu0 0.0
  %178 = vmatprep.subr.mxu0 0.0
  %179 = vmatpush2.msra.mxu0 0.0
  %180 = vmatprep.subr.mxu0 0.0
  %181 = vmatpush2.msra.mxu0 0.0
  %182 = vmatprep.subr.mxu0 0.0
  %183 = vmatpush2.msra.mxu0 0.0
  %184 = vmatprep.subr.mxu0 0.0
  %185 = vmatpush2.msra.mxu0 0.0
  %186 = vmatprep.subr.mxu0 0.0
  %187 = vmatpush2.msra.mxu0 0.0
  %188 = vmatprep.subr.mxu0 0.0
  %189 = vmatpush2.msra.mxu0 0.0
  %190 = vmatprep.subr.mxu0 0.0
  %191 = vmatpush2.msra.mxu0 0.0
  %192 = vmatprep.subr.mxu0 0.0
  %193 = vmatpush2.msra.mxu0 0.0
  %194 = vmatprep.subr.mxu0 0.0
  %195 = vmatpush2.msra.mxu0 0.0
  %196 = vmatprep.subr.mxu0 0.0
  %197 = vmatpush2.msra.mxu0 0.0
  %198 = vmatprep.subr.mxu0 0.0
  %199 = vmatpush2.msra.mxu0 0.0
  %200 = vmatprep.subr.mxu0 0.0
  %201 = vmatpush2.msra.mxu0 0.0
  %202 = vmatprep.mubr.f32.mxu0 0.0
  %203 = vmatmul.mubr.f32.gmra.mxu0 %v56
  %v204 = vpop.f32.mrf.mxu0
  %v205 = vadd.f32 %v50, %v204
  %v206 = vpop.f32.mrf.mxu0
  %207 = vmatprep.mubr.f32.mxu0 0.0
  %208 = vmatmul.mubr.f32.gmra.mxu0 %v59
  %v209 = vpop.f32.mrf.mxu0
  %v210 = vadd.f32 %v50, %v209
  %v211 = vpop.f32.mrf.mxu0
  %212 = vdwg.mxu0
  %v213 = vld [vmem:[%s3] sm:$0xff]
  %v214 = vld [vmem:[%s3 + $0x8] sm:$0xff]
  %v215 = vld [vmem:[%s3 + $0x10] sm:$0xff]
  %v216 = vld [vmem:[%s3 + $0x18] sm:$0xff]
  %v217 = vld [vmem:[%s3 + $0x20] sm:$0xff]
  %v218 = vld [vmem:[%s3 + $0x28] sm:$0xff]
  %v219 = vld [vmem:[%s3 + $0x30] sm:$0xff]
  %v220 = vld [vmem:[%s3 + $0x38] sm:$0xff]
  %v221 = vld [vmem:[%s3 + $0x40] sm:$0xff]
  %v222 = vld [vmem:[%s3 + $0x48] sm:$0xff]
  %v223 = vld [vmem:[%s3 + $0x50] sm:$0xff]
  %v224 = vld [vmem:[%s3 + $0x58] sm:$0xff]
  %v225 = vld [vmem:[%s3 + $0x60] sm:$0xff]
  %v226 = vld [vmem:[%s3 + $0x68] sm:$0xff]
  %v227 = vld [vmem:[%s3 + $0x70] sm:$0xff]
  %v228 = vld [vmem:[%s3 + $0x78] sm:$0xff]
  %v229 = vld [vmem:[%s3 + $0x80] sm:$0xff]
  %v230 = vld [vmem:[%s3 + $0x88] sm:$0xff]
  %v231 = vld [vmem:[%s3 + $0x90] sm:$0xff]
  %v232 = vld [vmem:[%s3 + $0x98] sm:$0xff]
  %v233 = vld [vmem:[%s3 + $0xa0] sm:$0xff]
  %v234 = vld [vmem:[%s3 + $0xa8] sm:$0xff]
  %v235 = vld [vmem:[%s3 + $0xb0] sm:$0xff]
  %v236 = vld [vmem:[%s3 + $0xb8] sm:$0xff]
  %v237 = vld [vmem:[%s3 + $0xc0] sm:$0xff]
  %v238 = vld [vmem:[%s3 + $0xc8] sm:$0xff]
  %v239 = vld [vmem:[%s3 + $0xd0] sm:$0xff]
  %v240 = vld [vmem:[%s3 + $0xd8] sm:$0xff]
  %v241 = vld [vmem:[%s3 + $0xe0] sm:$0xff]
  %v242 = vld [vmem:[%s3 + $0xe8] sm:$0xff]
  %v243 = vld [vmem:[%s3 + $0xf0] sm:$0xff]
  %v244 = vld [vmem:[%s3 + $0xf8] sm:$0xff]
  %v245 = vld [vmem:[%s3 + $0x100] sm:$0xff]
  %v246 = vld [vmem:[%s3 + $0x108] sm:$0xff]
  %v247 = vld [vmem:[%s3 + $0x110] sm:$0xff]
  %v248 = vld [vmem:[%s3 + $0x118] sm:$0xff]
  %v249 = vld [vmem:[%s3 + $0x120] sm:$0xff]
  %v250 = vld [vmem:[%s3 + $0x128] sm:$0xff]
  %v251 = vld [vmem:[%s3 + $0x130] sm:$0xff]
  %v252 = vld [vmem:[%s3 + $0x138] sm:$0xff]
  %v253 = vld [vmem:[%s3 + $0x140] sm:$0xff]
  %v254 = vld [vmem:[%s3 + $0x148] sm:$0xff]
  %v255 = vld [vmem:[%s3 + $0x150] sm:$0xff]
  %v256 = vld [vmem:[%s3 + $0x158] sm:$0xff]
  %v257 = vld [vmem:[%s3 + $0x160] sm:$0xff]
  %v258 = vld [vmem:[%s3 + $0x168] sm:$0xff]
  %v259 = vld [vmem:[%s3 + $0x170] sm:$0xff]
  %v260 = vld [vmem:[%s3 + $0x178] sm:$0xff]
  %v261 = vld [vmem:[%s5] sm:$0x1]
  %v263 = vlaneseq
  %v264 = vshrl.u32 %v263, 7
  %v265 = vsub.s32 0, %v264
  %v266 = vrot.slane %v261, %v265
  %v268 = vld [vmem:[#allocation2] sm:$0x3]
  %269 = vmatprep.subr.mxu0 %v259
  %270 = vmatpush1.msra.mxu0 %v258
  %271 = vmatprep.subr.mxu0 %v256
  %272 = vmatpush1.msra.mxu0 %v255
  %273 = vmatprep.subr.mxu0 %v253
  %274 = vmatpush1.msra.mxu0 %v252
  %275 = vmatprep.subr.mxu0 %v250
  %276 = vmatpush1.msra.mxu0 %v249
  %277 = vmatprep.subr.mxu0 %v247
  %278 = vmatpush1.msra.mxu0 %v246
  %279 = vmatprep.subr.mxu0 %v244
  %280 = vmatpush1.msra.mxu0 %v243
  %281 = vmatprep.subr.mxu0 %v241
  %282 = vmatpush1.msra.mxu0 %v240
  %283 = vmatprep.subr.mxu0 %v238
  %284 = vmatpush1.msra.mxu0 %v237
  %285 = vmatprep.subr.mxu0 %v235
  %286 = vmatpush1.msra.mxu0 %v234
  %287 = vmatprep.subr.mxu0 %v232
  %288 = vmatpush1.msra.mxu0 %v231
  %289 = vmatprep.subr.mxu0 %v229
  %290 = vmatpush1.msra.mxu0 %v228
  %291 = vmatprep.subr.mxu0 %v226
  %292 = vmatpush1.msra.mxu0 %v225
  %293 = vmatprep.subr.mxu0 %v223
  %294 = vmatpush1.msra.mxu0 %v222
  %295 = vmatprep.subr.mxu0 %v220
  %296 = vmatpush1.msra.mxu0 %v219
  %297 = vmatprep.subr.mxu0 %v217
  %298 = vmatpush1.msra.mxu0 %v216
  %299 = vmatprep.subr.mxu0 %v214
  %300 = vmatpush1.msra.mxu0 %v213
  %301 = vmatprep.subr.mxu0 0.0
  %302 = vmatpush2.msra.mxu0 0.0
  %303 = vmatprep.subr.mxu0 0.0
  %304 = vmatpush2.msra.mxu0 0.0
  %305 = vmatprep.subr.mxu0 0.0
  %306 = vmatpush2.msra.mxu0 0.0
  %307 = vmatprep.subr.mxu0 0.0
  %308 = vmatpush2.msra.mxu0 0.0
  %309 = vmatprep.subr.mxu0 0.0
  %310 = vmatpush2.msra.mxu0 0.0
  %311 = vmatprep.subr.mxu0 0.0
  %312 = vmatpush2.msra.mxu0 0.0
  %313 = vmatprep.subr.mxu0 0.0
  %314 = vmatpush2.msra.mxu0 0.0
  %315 = vmatprep.subr.mxu0 0.0
  %316 = vmatpush2.msra.mxu0 0.0
  %317 = vmatprep.subr.mxu0 0.0
  %318 = vmatpush2.msra.mxu0 0.0
  %319 = vmatprep.subr.mxu0 0.0
  %320 = vmatpush2.msra.mxu0 0.0
  %321 = vmatprep.subr.mxu0 0.0
  %322 = vmatpush2.msra.mxu0 0.0
  %323 = vmatprep.subr.mxu0 0.0
  %324 = vmatpush2.msra.mxu0 0.0
  %325 = vmatprep.subr.mxu0 0.0
  %326 = vmatpush2.msra.mxu0 0.0
  %327 = vmatprep.subr.mxu0 0.0
  %328 = vmatpush2.msra.mxu0 0.0
  %329 = vmatprep.subr.mxu0 0.0
  %330 = vmatpush2.msra.mxu0 0.0
  %331 = vmatprep.subr.mxu0 0.0
  %332 = vmatpush2.msra.mxu0 0.0
  %333 = vmatprep.mubr.f32.mxu0 0.0
  %334 = vmatmul.mubr.f32.gmra.mxu0 %v268
  %v335 = vpop.f32.mrf.mxu0
  %v336 = vadd.f32 0.0, %v335
  %v337 = vpop.f32.mrf.mxu0
  %v338 = vadd.f32 0.0, %v337
  %339 = vdwg.mxu0
  %340 = vmatprep.subr.mxu0 0.0
  %341 = vmatpush1.msra.mxu0 %v260
  %342 = vmatprep.subr.mxu0 0.0
  %343 = vmatpush1.msra.mxu0 %v257
  %344 = vmatprep.subr.mxu0 0.0
  %345 = vmatpush1.msra.mxu0 %v254
  %346 = vmatprep.subr.mxu0 0.0
  %347 = vmatpush1.msra.mxu0 %v251
  %348 = vmatprep.subr.mxu0 0.0
  %349 = vmatpush1.msra.mxu0 %v248
  %350 = vmatprep.subr.mxu0 0.0
  %351 = vmatpush1.msra.mxu0 %v245
  %352 = vmatprep.subr.mxu0 0.0
  %353 = vmatpush1.msra.mxu0 %v242
  %354 = vmatprep.subr.mxu0 0.0
  %355 = vmatpush1.msra.mxu0 %v239
  %356 = vmatprep.subr.mxu0 0.0
  %357 = vmatpush1.msra.mxu0 %v236
  %358 = vmatprep.subr.mxu0 0.0
  %359 = vmatpush1.msra.mxu0 %v233
  %360 = vmatprep.subr.mxu0 0.0
  %361 = vmatpush1.msra.mxu0 %v230
  %362 = vmatprep.subr.mxu0 0.0
  %363 = vmatpush1.msra.mxu0 %v227
  %364 = vmatprep.subr.mxu0 0.0
  %365 = vmatpush1.msra.mxu0 %v224
  %366 = vmatprep.subr.mxu0 0.0
  %367 = vmatpush1.msra.mxu0 %v221
  %368 = vmatprep.subr.mxu0 0.0
  %369 = vmatpush1.msra.mxu0 %v218
  %370 = vmatprep.subr.mxu0 0.0
  %371 = vmatpush1.msra.mxu0 %v215
  %372 = vmatprep.subr.mxu0 0.0
  %373 = vmatpush2.msra.mxu0 0.0
  %374 = vmatprep.subr.mxu0 0.0
  %375 = vmatpush2.msra.mxu0 0.0
  %376 = vmatprep.subr.mxu0 0.0
  %377 = vmatpush2.msra.mxu0 0.0
  %378 = vmatprep.subr.mxu0 0.0
  %379 = vmatpush2.msra.mxu0 0.0
  %380 = vmatprep.subr.mxu0 0.0
  %381 = vmatpush2.msra.mxu0 0.0
  %382 = vmatprep.subr.mxu0 0.0
  %383 = vmatpush2.msra.mxu0 0.0
  %384 = vmatprep.subr.mxu0 0.0
  %385 = vmatpush2.msra.mxu0 0.0
  %386 = vmatprep.subr.mxu0 0.0
  %387 = vmatpush2.msra.mxu0 0.0
  %388 = vmatprep.subr.mxu0 0.0
  %389 = vmatpush2.msra.mxu0 0.0
  %390 = vmatprep.subr.mxu0 0.0
  %391 = vmatpush2.msra.mxu0 0.0
  %392 = vmatprep.subr.mxu0 0.0
  %393 = vmatpush2.msra.mxu0 0.0
  %394 = vmatprep.subr.mxu0 0.0
  %395 = vmatpush2.msra.mxu0 0.0
  %396 = vmatprep.subr.mxu0 0.0
  %397 = vmatpush2.msra.mxu0 0.0
  %398 = vmatprep.subr.mxu0 0.0
  %399 = vmatpush2.msra.mxu0 0.0
  %400 = vmatprep.subr.mxu0 0.0
  %401 = vmatpush2.msra.mxu0 0.0
  %402 = vmatprep.subr.mxu0 0.0
  %403 = vmatpush2.msra.mxu0 0.0
  %404 = vmatprep.mubr.f32.mxu0 0.0
  %405 = vmatmul.mubr.f32.gmra.mxu0 %v268
  %v406 = vpop.f32.mrf.mxu0
  %v407 = vadd.f32 0.0, %v406
  %v408 = vpop.f32.mrf.mxu0
  %409 = vdwg.mxu0
  %v411 = vrot.slane %v336, 1
  %v414 = vadd.f32 %v128, %v336
  %v415 = vadd.f32 %v134, %v411
  %v416 = vmul.f32 %v414, 0.5
  %v417 = vmul.f32 %v415, 0.5
  %v418 = vtanh.pop %v416
  %v419 = vtanh.pop %v417
  %v420 = vmul.f32 %v418, 0.5
  %v421 = vmul.f32 %v419, 0.5
  %v422 = vadd.f32 %v420, 0.5
  %v423 = vadd.f32 %v421, 0.5
  %v425 = vrot.slane %v338, 1
  %v428 = vadd.f32 %v130, %v338
  %v429 = vadd.f32 %v136, %v425
  %v430 = vmul.f32 %v428, 0.5
  %v431 = vmul.f32 %v429, 0.5
  %v432 = vtanh.pop %v430
  %v433 = vtanh.pop %v431
  %v434 = vmul.f32 %v432, 0.5
  %v435 = vmul.f32 %v433, 0.5
  %v436 = vadd.f32 %v434, 0.5
  %v437 = vadd.f32 %v435, 0.5
  %v438 = vadd.f32 %v407, %v266
  %v440 = vrot.slane %v438, 1
  %v443 = vmul.f32 %v422, %v438
  %v444 = vmul.f32 %v423, %v440
  %v445 = vadd.f32 %v205, %v443
  %v446 = vadd.f32 %v210, %v444
  %v447 = vtanh.pop %v445
  %v448 = vtanh.pop %v446
  %v449 = vsub.f32 1.0, %v436
  %v450 = vsub.f32 1.0, %v437
  %v451 = vmul.f32 %v449, %v447
  %v452 = vmul.f32 %v450, %v448
  %v454 = vrot.slane %v268, 1
  %v457 = vmul.f32 %v436, %v268
  %v458 = vmul.f32 %v437, %v454
  %v459 = vadd.f32 %v451, %v457
  %v460 = vadd.f32 %v452, %v458
  %461 = vst [vmem:[%s6] sm:$0x1] %v459
  %462 = vst [vmem:[%s6 + $0x8] sm:$0x1] %v460
  %v465 = vrot.slane %v460, 7
  %vm466 = vcmask 1041409
  %v467 = vsel %vm466, %v465, %v459
  %469 = vmatprep.subr.mxu0 %v259
  %470 = vmatpush1.msra.mxu0 %v258
  %471 = vmatprep.subr.mxu0 %v256
  %472 = vmatpush1.msra.mxu0 %v255
  %473 = vmatprep.subr.mxu0 %v253
  %474 = vmatpush1.msra.mxu0 %v252
  %475 = vmatprep.subr.mxu0 %v250
  %476 = vmatpush1.msra.mxu0 %v249
  %477 = vmatprep.subr.mxu0 %v247
  %478 = vmatpush1.msra.mxu0 %v246
  %479 = vmatprep.subr.mxu0 %v244
  %480 = vmatpush1.msra.mxu0 %v243
  %481 = vmatprep.subr.mxu0 %v241
  %482 = vmatpush1.msra.mxu0 %v240
  %483 = vmatprep.subr.mxu0 %v238
  %484 = vmatpush1.msra.mxu0 %v237
  %485 = vmatprep.subr.mxu0 %v235
  %486 = vmatpush1.msra.mxu0 %v234
  %487 = vmatprep.subr.mxu0 %v232
  %488 = vmatpush1.msra.mxu0 %v231
  %489 = vmatprep.subr.mxu0 %v229
  %490 = vmatpush1.msra.mxu0 %v228
  %491 = vmatprep.subr.mxu0 %v226
  %492 = vmatpush1.msra.mxu0 %v225
  %493 = vmatprep.subr.mxu0 %v223
  %494 = vmatpush1.msra.mxu0 %v222
  %495 = vmatprep.subr.mxu0 %v220
  %496 = vmatpush1.msra.mxu0 %v219
  %497 = vmatprep.subr.mxu0 %v217
  %498 = vmatpush1.msra.mxu0 %v216
  %499 = vmatprep.subr.mxu0 %v214
  %500 = vmatpush1.msra.mxu0 %v213
  %501 = vmatprep.subr.mxu0 0.0
  %502 = vmatpush2.msra.mxu0 0.0
  %503 = vmatprep.subr.mxu0 0.0
  %504 = vmatpush2.msra.mxu0 0.0
  %505 = vmatprep.subr.mxu0 0.0
  %506 = vmatpush2.msra.mxu0 0.0
  %507 = vmatprep.subr.mxu0 0.0
  %508 = vmatpush2.msra.mxu0 0.0
  %509 = vmatprep.subr.mxu0 0.0
  %510 = vmatpush2.msra.mxu0 0.0
  %511 = vmatprep.subr.mxu0 0.0
  %512 = vmatpush2.msra.mxu0 0.0
  %513 = vmatprep.subr.mxu0 0.0
  %514 = vmatpush2.msra.mxu0 0.0
  %515 = vmatprep.subr.mxu0 0.0
  %516 = vmatpush2.msra.mxu0 0.0
  %517 = vmatprep.subr.mxu0 0.0
  %518 = vmatpush2.msra.mxu0 0.0
  %519 = vmatprep.subr.mxu0 0.0
  %520 = vmatpush2.msra.mxu0 0.0
  %521 = vmatprep.subr.mxu0 0.0
  %522 = vmatpush2.msra.mxu0 0.0
  %523 = vmatprep.subr.mxu0 0.0
  %524 = vmatpush2.msra.mxu0 0.0
  %525 = vmatprep.subr.mxu0 0.0
  %526 = vmatpush2.msra.mxu0 0.0
  %527 = vmatprep.subr.mxu0 0.0
  %528 = vmatpush2.msra.mxu0 0.0
  %529 = vmatprep.subr.mxu0 0.0
  %530 = vmatpush2.msra.mxu0 0.0
  %531 = vmatprep.subr.mxu0 0.0
  %532 = vmatpush2.msra.mxu0 0.0
  %533 = vmatprep.mubr.f32.mxu0 0.0
  %534 = vmatmul.mubr.f32.gmra.mxu0 %v467
  %v535 = vpop.f32.mrf.mxu0
  %v536 = vadd.f32 0.0, %v535
  %v537 = vpop.f32.mrf.mxu0
  %v538 = vadd.f32 0.0, %v537
  %539 = vdwg.mxu0
  %540 = vmatprep.subr.mxu0 0.0
  %541 = vmatpush1.msra.mxu0 %v260
  %542 = vmatprep.subr.mxu0 0.0
  %543 = vmatpush1.msra.mxu0 %v257
  %544 = vmatprep.subr.mxu0 0.0
  %545 = vmatpush1.msra.mxu0 %v254
  %546 = vmatprep.subr.mxu0 0.0
  %547 = vmatpush1.msra.mxu0 %v251
  %548 = vmatprep.subr.mxu0 0.0
  %549 = vmatpush1.msra.mxu0 %v248
  %550 = vmatprep.subr.mxu0 0.0
  %551 = vmatpush1.msra.mxu0 %v245
  %552 = vmatprep.subr.mxu0 0.0
  %553 = vmatpush1.msra.mxu0 %v242
  %554 = vmatprep.subr.mxu0 0.0
  %555 = vmatpush1.msra.mxu0 %v239
  %556 = vmatprep.subr.mxu0 0.0
  %557 = vmatpush1.msra.mxu0 %v236
  %558 = vmatprep.subr.mxu0 0.0
  %559 = vmatpush1.msra.mxu0 %v233
  %560 = vmatprep.subr.mxu0 0.0
  %561 = vmatpush1.msra.mxu0 %v230
  %562 = vmatprep.subr.mxu0 0.0
  %563 = vmatpush1.msra.mxu0 %v227
  %564 = vmatprep.subr.mxu0 0.0
  %565 = vmatpush1.msra.mxu0 %v224
  %566 = vmatprep.subr.mxu0 0.0
  %567 = vmatpush1.msra.mxu0 %v221
  %568 = vmatprep.subr.mxu0 0.0
  %569 = vmatpush1.msra.mxu0 %v218
  %570 = vmatprep.subr.mxu0 0.0
  %571 = vmatpush1.msra.mxu0 %v215
  %572 = vmatprep.subr.mxu0 0.0
  %573 = vmatpush2.msra.mxu0 0.0
  %574 = vmatprep.subr.mxu0 0.0
  %575 = vmatpush2.msra.mxu0 0.0
  %576 = vmatprep.subr.mxu0 0.0
  %577 = vmatpush2.msra.mxu0 0.0
  %578 = vmatprep.subr.mxu0 0.0
  %579 = vmatpush2.msra.mxu0 0.0
  %580 = vmatprep.subr.mxu0 0.0
  %581 = vmatpush2.msra.mxu0 0.0
  %582 = vmatprep.subr.mxu0 0.0
  %583 = vmatpush2.msra.mxu0 0.0
  %584 = vmatprep.subr.mxu0 0.0
  %585 = vmatpush2.msra.mxu0 0.0
  %586 = vmatprep.subr.mxu0 0.0
  %587 = vmatpush2.msra.mxu0 0.0
  %588 = vmatprep.subr.mxu0 0.0
  %589 = vmatpush2.msra.mxu0 0.0
  %590 = vmatprep.subr.mxu0 0.0
  %591 = vmatpush2.msra.mxu0 0.0
  %592 = vmatprep.subr.mxu0 0.0
  %593 = vmatpush2.msra.mxu0 0.0
  %594 = vmatprep.subr.mxu0 0.0
  %595 = vmatpush2.msra.mxu0 0.0
  %596 = vmatprep.subr.mxu0 0.0
  %597 = vmatpush2.msra.mxu0 0.0
  %598 = vmatprep.subr.mxu0 0.0
  %599 = vmatpush2.msra.mxu0 0.0
  %600 = vmatprep.subr.mxu0 0.0
  %601 = vmatpush2.msra.mxu0 0.0
  %602 = vmatprep.subr.mxu0 0.0
  %603 = vmatpush2.msra.mxu0 0.0
  %604 = vmatprep.mubr.f32.mxu0 0.0
  %605 = vmatmul.mubr.f32.gmra.mxu0 %v467
  %v606 = vpop.f32.mrf.mxu0
  %v607 = vadd.f32 0.0, %v606
  %v608 = vpop.f32.mrf.mxu0
  %609 = vdwg.mxu0
  %v611 = vrot.slane %v536, 7
  %v614 = vadd.f32 %v128, %v611
  %v615 = vadd.f32 %v134, %v536
  %v616 = vmul.f32 %v614, 0.5
  %v617 = vmul.f32 %v615, 0.5
  %v618 = vtanh.pop %v616
  %v619 = vtanh.pop %v617
  %v620 = vmul.f32 %v618, 0.5
  %v621 = vmul.f32 %v619, 0.5
  %v622 = vadd.f32 %v620, 0.5
  %v623 = vadd.f32 %v621, 0.5
  %v625 = vrot.slane %v538, 7
  %v628 = vadd.f32 %v130, %v625
  %v629 = vadd.f32 %v136, %v538
  %v630 = vmul.f32 %v628, 0.5
  %v631 = vmul.f32 %v629, 0.5
  %v632 = vtanh.pop %v630
  %v633 = vtanh.pop %v631
  %v634 = vmul.f32 %v632, 0.5
  %v635 = vmul.f32 %v633, 0.5
  %v636 = vadd.f32 %v634, 0.5
  %v637 = vadd.f32 %v635, 0.5
  %v638 = vadd.f32 %v607, %v266
  %v640 = vrot.slane %v638, 7
  %v643 = vmul.f32 %v622, %v640
  %v644 = vmul.f32 %v623, %v638
  %v645 = vadd.f32 %v205, %v643
  %v646 = vadd.f32 %v210, %v644
  %v647 = vtanh.pop %v645
  %v648 = vtanh.pop %v646
  %v649 = vsub.f32 1.0, %v636
  %v650 = vsub.f32 1.0, %v637
  %v651 = vmul.f32 %v649, %v647
  %v652 = vmul.f32 %v650, %v648
  %v653 = vrot.slane %v459, 7
  %v656 = vmul.f32 %v636, %v653
  %v657 = vmul.f32 %v637, %v465
  %v658 = vadd.f32 %v651, %v656
  %v659 = vadd.f32 %v652, %v657
  %660 = vst [vmem:[%s6] sm:$0x2] %v658
  %661 = vst [vmem:[%s6 + $0x8] sm:$0x2] %v659
  %v664 = vrot.slane %v658, 1
  %v665 = vsel %vm466, %v659, %v664
  %667 = vmatprep.subr.mxu0 %v259
  %668 = vmatpush1.msra.mxu0 %v258
  %669 = vmatprep.subr.mxu0 %v256
  %670 = vmatpush1.msra.mxu0 %v255
  %671 = vmatprep.subr.mxu0 %v253
  %672 = vmatpush1.msra.mxu0 %v252
  %673 = vmatprep.subr.mxu0 %v250
  %674 = vmatpush1.msra.mxu0 %v249
  %675 = vmatprep.subr.mxu0 %v247
  %676 = vmatpush1.msra.mxu0 %v246
  %677 = vmatprep.subr.mxu0 %v244
  %678 = vmatpush1.msra.mxu0 %v243
  %679 = vmatprep.subr.mxu0 %v241
  %680 = vmatpush1.msra.mxu0 %v240
  %681 = vmatprep.subr.mxu0 %v238
  %682 = vmatpush1.msra.mxu0 %v237
  %683 = vmatprep.subr.mxu0 %v235
  %684 = vmatpush1.msra.mxu0 %v234
  %685 = vmatprep.subr.mxu0 %v232
  %686 = vmatpush1.msra.mxu0 %v231
  %687 = vmatprep.subr.mxu0 %v229
  %688 = vmatpush1.msra.mxu0 %v228
  %689 = vmatprep.subr.mxu0 %v226
  %690 = vmatpush1.msra.mxu0 %v225
  %691 = vmatprep.subr.mxu0 %v223
  %692 = vmatpush1.msra.mxu0 %v222
  %693 = vmatprep.subr.mxu0 %v220
  %694 = vmatpush1.msra.mxu0 %v219
  %695 = vmatprep.subr.mxu0 %v217
  %696 = vmatpush1.msra.mxu0 %v216
  %697 = vmatprep.subr.mxu0 %v214
  %698 = vmatpush1.msra.mxu0 %v213
  %699 = vmatprep.subr.mxu0 0.0
  %700 = vmatpush2.msra.mxu0 0.0
  %701 = vmatprep.subr.mxu0 0.0
  %702 = vmatpush2.msra.mxu0 0.0
  %703 = vmatprep.subr.mxu0 0.0
  %704 = vmatpush2.msra.mxu0 0.0
  %705 = vmatprep.subr.mxu0 0.0
  %706 = vmatpush2.msra.mxu0 0.0
  %707 = vmatprep.subr.mxu0 0.0
  %708 = vmatpush2.msra.mxu0 0.0
  %709 = vmatprep.subr.mxu0 0.0
  %710 = vmatpush2.msra.mxu0 0.0
  %711 = vmatprep.subr.mxu0 0.0
  %712 = vmatpush2.msra.mxu0 0.0
  %713 = vmatprep.subr.mxu0 0.0
  %714 = vmatpush2.msra.mxu0 0.0
  %715 = vmatprep.subr.mxu0 0.0
  %716 = vmatpush2.msra.mxu0 0.0
  %717 = vmatprep.subr.mxu0 0.0
  %718 = vmatpush2.msra.mxu0 0.0
  %719 = vmatprep.subr.mxu0 0.0
  %720 = vmatpush2.msra.mxu0 0.0
  %721 = vmatprep.subr.mxu0 0.0
  %722 = vmatpush2.msra.mxu0 0.0
  %723 = vmatprep.subr.mxu0 0.0
  %724 = vmatpush2.msra.mxu0 0.0
  %725 = vmatprep.subr.mxu0 0.0
  %726 = vmatpush2.msra.mxu0 0.0
  %727 = vmatprep.subr.mxu0 0.0
  %728 = vmatpush2.msra.mxu0 0.0
  %729 = vmatprep.subr.mxu0 0.0
  %730 = vmatpush2.msra.mxu0 0.0
  %731 = vmatprep.mubr.f32.mxu0 0.0
  %732 = vmatmul.mubr.f32.gmra.mxu0 %v665
  %v733 = vpop.f32.mrf.mxu0
  %v734 = vadd.f32 0.0, %v733
  %v735 = vpop.f32.mrf.mxu0
  %v736 = vadd.f32 0.0, %v735
  %737 = vdwg.mxu0
  %738 = vmatprep.subr.mxu0 0.0
  %739 = vmatpush1.msra.mxu0 %v260
  %740 = vmatprep.subr.mxu0 0.0
  %741 = vmatpush1.msra.mxu0 %v257
  %742 = vmatprep.subr.mxu0 0.0
  %743 = vmatpush1.msra.mxu0 %v254
  %744 = vmatprep.subr.mxu0 0.0
  %745 = vmatpush1.msra.mxu0 %v251
  %746 = vmatprep.subr.mxu0 0.0
  %747 = vmatpush1.msra.mxu0 %v248
  %748 = vmatprep.subr.mxu0 0.0
  %749 = vmatpush1.msra.mxu0 %v245
  %750 = vmatprep.subr.mxu0 0.0
  %751 = vmatpush1.msra.mxu0 %v242
  %752 = vmatprep.subr.mxu0 0.0
  %753 = vmatpush1.msra.mxu0 %v239
  %754 = vmatprep.subr.mxu0 0.0
  %755 = vmatpush1.msra.mxu0 %v236
  %756 = vmatprep.subr.mxu0 0.0
  %757 = vmatpush1.msra.mxu0 %v233
  %758 = vmatprep.subr.mxu0 0.0
  %759 = vmatpush1.msra.mxu0 %v230
  %760 = vmatprep.subr.mxu0 0.0
  %761 = vmatpush1.msra.mxu0 %v227
  %762 = vmatprep.subr.mxu0 0.0
  %763 = vmatpush1.msra.mxu0 %v224
  %764 = vmatprep.subr.mxu0 0.0
  %765 = vmatpush1.msra.mxu0 %v221
  %766 = vmatprep.subr.mxu0 0.0
  %767 = vmatpush1.msra.mxu0 %v218
  %768 = vmatprep.subr.mxu0 0.0
  %769 = vmatpush1.msra.mxu0 %v215
  %770 = vmatprep.subr.mxu0 0.0
  %771 = vmatpush2.msra.mxu0 0.0
  %772 = vmatprep.subr.mxu0 0.0
  %773 = vmatpush2.msra.mxu0 0.0
  %774 = vmatprep.subr.mxu0 0.0
  %775 = vmatpush2.msra.mxu0 0.0
  %776 = vmatprep.subr.mxu0 0.0
  %777 = vmatpush2.msra.mxu0 0.0
  %778 = vmatprep.subr.mxu0 0.0
  %779 = vmatpush2.msra.mxu0 0.0
  %780 = vmatprep.subr.mxu0 0.0
  %781 = vmatpush2.msra.mxu0 0.0
  %782 = vmatprep.subr.mxu0 0.0
  %783 = vmatpush2.msra.mxu0 0.0
  %784 = vmatprep.subr.mxu0 0.0
  %785 = vmatpush2.msra.mxu0 0.0
  %786 = vmatprep.subr.mxu0 0.0
  %787 = vmatpush2.msra.mxu0 0.0
  %788 = vmatprep.subr.mxu0 0.0
  %789 = vmatpush2.msra.mxu0 0.0
  %790 = vmatprep.subr.mxu0 0.0
  %791 = vmatpush2.msra.mxu0 0.0
  %792 = vmatprep.subr.mxu0 0.0
  %793 = vmatpush2.msra.mxu0 0.0
  %794 = vmatprep.subr.mxu0 0.0
  %795 = vmatpush2.msra.mxu0 0.0
  %796 = vmatprep.subr.mxu0 0.0
  %797 = vmatpush2.msra.mxu0 0.0
  %798 = vmatprep.subr.mxu0 0.0
  %799 = vmatpush2.msra.mxu0 0.0
  %800 = vmatprep.subr.mxu0 0.0
  %801 = vmatpush2.msra.mxu0 0.0
  %802 = vmatprep.mubr.f32.mxu0 0.0
  %803 = vmatmul.mubr.f32.gmra.mxu0 %v665
  %v804 = vpop.f32.mrf.mxu0
  %v805 = vadd.f32 0.0, %v804
  %v806 = vpop.f32.mrf.mxu0
  %807 = vdwg.mxu0
  %v809 = vrot.slane %v734, 6
  %v810 = vrot.slane %v734, 7
  %v813 = vadd.f32 %v128, %v809
  %v814 = vadd.f32 %v134, %v810
  %v815 = vmul.f32 %v813, 0.5
  %v816 = vmul.f32 %v814, 0.5
  %v817 = vtanh.pop %v815
  %v818 = vtanh.pop %v816
  %v819 = vmul.f32 %v817, 0.5
  %v820 = vmul.f32 %v818, 0.5
  %v821 = vadd.f32 %v819, 0.5
  %v822 = vadd.f32 %v820, 0.5
  %v824 = vrot.slane %v736, 6
  %v825 = vrot.slane %v736, 7
  %v828 = vadd.f32 %v130, %v824
  %v829 = vadd.f32 %v136, %v825
  %v830 = vmul.f32 %v828, 0.5
  %v831 = vmul.f32 %v829, 0.5
  %v832 = vtanh.pop %v830
  %v833 = vtanh.pop %v831
  %v834 = vmul.f32 %v832, 0.5
  %v835 = vmul.f32 %v833, 0.5
  %v836 = vadd.f32 %v834, 0.5
  %v837 = vadd.f32 %v835, 0.5
  %v838 = vadd.f32 %v805, %v266
  %v840 = vrot.slane %v838, 6
  %v841 = vrot.slane %v838, 7
  %v844 = vmul.f32 %v821, %v840
  %v845 = vmul.f32 %v822, %v841
  %v846 = vadd.f32 %v205, %v844
  %v847 = vadd.f32 %v210, %v845
  %v848 = vtanh.pop %v846
  %v849 = vtanh.pop %v847
  %v850 = vsub.f32 1.0, %v836
  %v851 = vsub.f32 1.0, %v837
  %v852 = vmul.f32 %v850, %v848
  %v853 = vmul.f32 %v851, %v849
  %v854 = vrot.slane %v658, 7
  %v855 = vrot.slane %v659, 7
  %v858 = vmul.f32 %v836, %v854
  %v859 = vmul.f32 %v837, %v855
  %v860 = vadd.f32 %v852, %v858
  %v861 = vadd.f32 %v853, %v859
  %862 = vst [vmem:[%s6] sm:$0x4] %v860
  %863 = vst [vmem:[%s6 + $0x8] sm:$0x4] %v861
  %v866 = vrot.slane %v860, 2
  %v867 = vrot.slane %v861, 1
  %v868 = vsel %vm466, %v867, %v866
  %870 = vmatprep.subr.mxu0 %v259
  %871 = vmatpush1.msra.mxu0 %v258
  %872 = vmatprep.subr.mxu0 %v256
  %873 = vmatpush1.msra.mxu0 %v255
  %874 = vmatprep.subr.mxu0 %v253
  %875 = vmatpush1.msra.mxu0 %v252
  %876 = vmatprep.subr.mxu0 %v250
  %877 = vmatpush1.msra.mxu0 %v249
  %878 = vmatprep.subr.mxu0 %v247
  %879 = vmatpush1.msra.mxu0 %v246
  %880 = vmatprep.subr.mxu0 %v244
  %881 = vmatpush1.msra.mxu0 %v243
  %882 = vmatprep.subr.mxu0 %v241
  %883 = vmatpush1.msra.mxu0 %v240
  %884 = vmatprep.subr.mxu0 %v238
  %885 = vmatpush1.msra.mxu0 %v237
  %886 = vmatprep.subr.mxu0 %v235
  %887 = vmatpush1.msra.mxu0 %v234
  %888 = vmatprep.subr.mxu0 %v232
  %889 = vmatpush1.msra.mxu0 %v231
  %890 = vmatprep.subr.mxu0 %v229
  %891 = vmatpush1.msra.mxu0 %v228
  %892 = vmatprep.subr.mxu0 %v226
  %893 = vmatpush1.msra.mxu0 %v225
  %894 = vmatprep.subr.mxu0 %v223
  %895 = vmatpush1.msra.mxu0 %v222
  %896 = vmatprep.subr.mxu0 %v220
  %897 = vmatpush1.msra.mxu0 %v219
  %898 = vmatprep.subr.mxu0 %v217
  %899 = vmatpush1.msra.mxu0 %v216
  %900 = vmatprep.subr.mxu0 %v214
  %901 = vmatpush1.msra.mxu0 %v213
  %902 = vmatprep.subr.mxu0 0.0
  %903 = vmatpush2.msra.mxu0 0.0
  %904 = vmatprep.subr.mxu0 0.0
  %905 = vmatpush2.msra.mxu0 0.0
  %906 = vmatprep.subr.mxu0 0.0
  %907 = vmatpush2.msra.mxu0 0.0
  %908 = vmatprep.subr.mxu0 0.0
  %909 = vmatpush2.msra.mxu0 0.0
  %910 = vmatprep.subr.mxu0 0.0
  %911 = vmatpush2.msra.mxu0 0.0
  %912 = vmatprep.subr.mxu0 0.0
  %913 = vmatpush2.msra.mxu0 0.0
  %914 = vmatprep.subr.mxu0 0.0
  %915 = vmatpush2.msra.mxu0 0.0
  %916 = vmatprep.subr.mxu0 0.0
  %917 = vmatpush2.msra.mxu0 0.0
  %918 = vmatprep.subr.mxu0 0.0
  %919 = vmatpush2.msra.mxu0 0.0
  %920 = vmatprep.subr.mxu0 0.0
  %921 = vmatpush2.msra.mxu0 0.0
  %922 = vmatprep.subr.mxu0 0.0
  %923 = vmatpush2.msra.mxu0 0.0
  %924 = vmatprep.subr.mxu0 0.0
  %925 = vmatpush2.msra.mxu0 0.0
  %926 = vmatprep.subr.mxu0 0.0
  %927 = vmatpush2.msra.mxu0 0.0
  %928 = vmatprep.subr.mxu0 0.0
  %929 = vmatpush2.msra.mxu0 0.0
  %930 = vmatprep.subr.mxu0 0.0
  %931 = vmatpush2.msra.mxu0 0.0
  %932 = vmatprep.subr.mxu0 0.0
  %933 = vmatpush2.msra.mxu0 0.0
  %934 = vmatprep.mubr.f32.mxu0 0.0
  %935 = vmatmul.mubr.f32.gmra.mxu0 %v868
  %v936 = vpop.f32.mrf.mxu0
  %v937 = vadd.f32 0.0, %v936
  %v938 = vpop.f32.mrf.mxu0
  %v939 = vadd.f32 0.0, %v938
  %940 = vdwg.mxu0
  %941 = vmatprep.subr.mxu0 0.0
  %942 = vmatpush1.msra.mxu0 %v260
  %943 = vmatprep.subr.mxu0 0.0
  %944 = vmatpush1.msra.mxu0 %v257
  %945 = vmatprep.subr.mxu0 0.0
  %946 = vmatpush1.msra.mxu0 %v254
  %947 = vmatprep.subr.mxu0 0.0
  %948 = vmatpush1.msra.mxu0 %v251
  %949 = vmatprep.subr.mxu0 0.0
  %950 = vmatpush1.msra.mxu0 %v248
  %951 = vmatprep.subr.mxu0 0.0
  %952 = vmatpush1.msra.mxu0 %v245
  %953 = vmatprep.subr.mxu0 0.0
  %954 = vmatpush1.msra.mxu0 %v242
  %955 = vmatprep.subr.mxu0 0.0
  %956 = vmatpush1.msra.mxu0 %v239
  %957 = vmatprep.subr.mxu0 0.0
  %958 = vmatpush1.msra.mxu0 %v236
  %959 = vmatprep.subr.mxu0 0.0
  %960 = vmatpush1.msra.mxu0 %v233
  %961 = vmatprep.subr.mxu0 0.0
  %962 = vmatpush1.msra.mxu0 %v230
  %963 = vmatprep.subr.mxu0 0.0
  %964 = vmatpush1.msra.mxu0 %v227
  %965 = vmatprep.subr.mxu0 0.0
  %966 = vmatpush1.msra.mxu0 %v224
  %967 = vmatprep.subr.mxu0 0.0
  %968 = vmatpush1.msra.mxu0 %v221
  %969 = vmatprep.subr.mxu0 0.0
  %970 = vmatpush1.msra.mxu0 %v218
  %971 = vmatprep.subr.mxu0 0.0
  %972 = vmatpush1.msra.mxu0 %v215
  %973 = vmatprep.subr.mxu0 0.0
  %974 = vmatpush2.msra.mxu0 0.0
  %975 = vmatprep.subr.mxu0 0.0
  %976 = vmatpush2.msra.mxu0 0.0
  %977 = vmatprep.subr.mxu0 0.0
  %978 = vmatpush2.msra.mxu0 0.0
  %979 = vmatprep.subr.mxu0 0.0
  %980 = vmatpush2.msra.mxu0 0.0
  %981 = vmatprep.subr.mxu0 0.0
  %982 = vmatpush2.msra.mxu0 0.0
  %983 = vmatprep.subr.mxu0 0.0
  %984 = vmatpush2.msra.mxu0 0.0
  %985 = vmatprep.subr.mxu0 0.0
  %986 = vmatpush2.msra.mxu0 0.0
  %987 = vmatprep.subr.mxu0 0.0
  %988 = vmatpush2.msra.mxu0 0.0
  %989 = vmatprep.subr.mxu0 0.0
  %990 = vmatpush2.msra.mxu0 0.0
  %991 = vmatprep.subr.mxu0 0.0
  %992 = vmatpush2.msra.mxu0 0.0
  %993 = vmatprep.subr.mxu0 0.0
  %994 = vmatpush2.msra.mxu0 0.0
  %995 = vmatprep.subr.mxu0 0.0
  %996 = vmatpush2.msra.mxu0 0.0
  %997 = vmatprep.subr.mxu0 0.0
  %998 = vmatpush2.msra.mxu0 0.0
  %999 = vmatprep.subr.mxu0 0.0
  %1000 = vmatpush2.msra.mxu0 0.0
  %1001 = vmatprep.subr.mxu0 0.0
  %1002 = vmatpush2.msra.mxu0 0.0
  %1003 = vmatprep.subr.mxu0 0.0
  %1004 = vmatpush2.msra.mxu0 0.0
  %1005 = vmatprep.mubr.f32.mxu0 0.0
  %1006 = vmatmul.mubr.f32.gmra.mxu0 %v868
  %v1007 = vpop.f32.mrf.mxu0
  %v1008 = vadd.f32 0.0, %v1007
  %v1009 = vpop.f32.mrf.mxu0
  %1010 = vdwg.mxu0
  %v1012 = vrot.slane %v937, 5
  %v1013 = vrot.slane %v937, 6
  %v1016 = vadd.f32 %v128, %v1012
  %v1017 = vadd.f32 %v134, %v1013
  %v1018 = vmul.f32 %v1016, 0.5
  %v1019 = vmul.f32 %v1017, 0.5
  %v1020 = vtanh.pop %v1018
  %v1021 = vtanh.pop %v1019
  %v1022 = vmul.f32 %v1020, 0.5
  %v1023 = vmul.f32 %v1021, 0.5
  %v1024 = vadd.f32 %v1022, 0.5
  %v1025 = vadd.f32 %v1023, 0.5
  %v1027 = vrot.slane %v939, 5
  %v1028 = vrot.slane %v939, 6
  %v1031 = vadd.f32 %v130, %v1027
  %v1032 = vadd.f32 %v136, %v1028
  %v1033 = vmul.f32 %v1031, 0.5
  %v1034 = vmul.f32 %v1032, 0.5
  %v1035 = vtanh.pop %v1033
  %v1036 = vtanh.pop %v1034
  %v1037 = vmul.f32 %v1035, 0.5
  %v1038 = vmul.f32 %v1036, 0.5
  %v1039 = vadd.f32 %v1037, 0.5
  %v1040 = vadd.f32 %v1038, 0.5
  %v1041 = vadd.f32 %v1008, %v266
  %v1043 = vrot.slane %v1041, 5
  %v1044 = vrot.slane %v1041, 6
  %v1047 = vmul.f32 %v1024, %v1043
  %v1048 = vmul.f32 %v1025, %v1044
  %v1049 = vadd.f32 %v205, %v1047
  %v1050 = vadd.f32 %v210, %v1048
  %v1051 = vtanh.pop %v1049
  %v1052 = vtanh.pop %v1050
  %v1053 = vsub.f32 1.0, %v1039
  %v1054 = vsub.f32 1.0, %v1040
  %v1055 = vmul.f32 %v1053, %v1051
  %v1056 = vmul.f32 %v1054, %v1052
  %v1057 = vrot.slane %v860, 7
  %v1058 = vrot.slane %v861, 7
  %v1061 = vmul.f32 %v1039, %v1057
  %v1062 = vmul.f32 %v1040, %v1058
  %v1063 = vadd.f32 %v1055, %v1061
  %v1064 = vadd.f32 %v1056, %v1062
  %1065 = vst [vmem:[%s6] sm:$0x8] %v1063
  %1066 = vst [vmem:[%s6 + $0x8] sm:$0x8] %v1064
  %v1069 = vrot.slane %v1063, 3
  %v1070 = vrot.slane %v1064, 2
  %v1071 = vsel %vm466, %v1070, %v1069
  %1073 = vmatprep.subr.mxu0 %v259
  %1074 = vmatpush1.msra.mxu0 %v258
  %1075 = vmatprep.subr.mxu0 %v256
  %1076 = vmatpush1.msra.mxu0 %v255
  %1077 = vmatprep.subr.mxu0 %v253
  %1078 = vmatpush1.msra.mxu0 %v252
  %1079 = vmatprep.subr.mxu0 %v250
  %1080 = vmatpush1.msra.mxu0 %v249
  %1081 = vmatprep.subr.mxu0 %v247
  %1082 = vmatpush1.msra.mxu0 %v246
  %1083 = vmatprep.subr.mxu0 %v244
  %1084 = vmatpush1.msra.mxu0 %v243
  %1085 = vmatprep.subr.mxu0 %v241
  %1086 = vmatpush1.msra.mxu0 %v240
  %1087 = vmatprep.subr.mxu0 %v238
  %1088 = vmatpush1.msra.mxu0 %v237
  %1089 = vmatprep.subr.mxu0 %v235
  %1090 = vmatpush1.msra.mxu0 %v234
  %1091 = vmatprep.subr.mxu0 %v232
  %1092 = vmatpush1.msra.mxu0 %v231
  %1093 = vmatprep.subr.mxu0 %v229
  %1094 = vmatpush1.msra.mxu0 %v228
  %1095 = vmatprep.subr.mxu0 %v226
  %1096 = vmatpush1.msra.mxu0 %v225
  %1097 = vmatprep.subr.mxu0 %v223
  %1098 = vmatpush1.msra.mxu0 %v222
  %1099 = vmatprep.subr.mxu0 %v220
  %1100 = vmatpush1.msra.mxu0 %v219
  %1101 = vmatprep.subr.mxu0 %v217
  %1102 = vmatpush1.msra.mxu0 %v216
  %1103 = vmatprep.subr.mxu0 %v214
  %1104 = vmatpush1.msra.mxu0 %v213
  %1105 = vmatprep.subr.mxu0 0.0
  %1106 = vmatpush2.msra.mxu0 0.0
  %1107 = vmatprep.subr.mxu0 0.0
  %1108 = vmatpush2.msra.mxu0 0.0
  %1109 = vmatprep.subr.mxu0 0.0
  %1110 = vmatpush2.msra.mxu0 0.0
  %1111 = vmatprep.subr.mxu0 0.0
  %1112 = vmatpush2.msra.mxu0 0.0
  %1113 = vmatprep.subr.mxu0 0.0
  %1114 = vmatpush2.msra.mxu0 0.0
  %1115 = vmatprep.subr.mxu0 0.0
  %1116 = vmatpush2.msra.mxu0 0.0
  %1117 = vmatprep.subr.mxu0 0.0
  %1118 = vmatpush2.msra.mxu0 0.0
  %1119 = vmatprep.subr.mxu0 0.0
  %1120 = vmatpush2.msra.mxu0 0.0
  %1121 = vmatprep.subr.mxu0 0.0
  %1122 = vmatpush2.msra.mxu0 0.0
  %1123 = vmatprep.subr.mxu0 0.0
  %1124 = vmatpush2.msra.mxu0 0.0
  %1125 = vmatprep.subr.mxu0 0.0
  %1126 = vmatpush2.msra.mxu0 0.0
  %1127 = vmatprep.subr.mxu0 0.0
  %1128 = vmatpush2.msra.mxu0 0.0
  %1129 = vmatprep.subr.mxu0 0.0
  %1130 = vmatpush2.msra.mxu0 0.0
  %1131 = vmatprep.subr.mxu0 0.0
  %1132 = vmatpush2.msra.mxu0 0.0
  %1133 = vmatprep.subr.mxu0 0.0
  %1134 = vmatpush2.msra.mxu0 0.0
  %1135 = vmatprep.subr.mxu0 0.0
  %1136 = vmatpush2.msra.mxu0 0.0
  %1137 = vmatprep.mubr.f32.mxu0 0.0
  %1138 = vmatmul.mubr.f32.gmra.mxu0 %v1071
  %v1139 = vpop.f32.mrf.mxu0
  %v1140 = vadd.f32 0.0, %v1139
  %v1141 = vpop.f32.mrf.mxu0
  %v1142 = vadd.f32 0.0, %v1141
  %1143 = vdwg.mxu0
  %1144 = vmatprep.subr.mxu0 0.0
  %1145 = vmatpush1.msra.mxu0 %v260
  %1146 = vmatprep.subr.mxu0 0.0
  %1147 = vmatpush1.msra.mxu0 %v257
  %1148 = vmatprep.subr.mxu0 0.0
  %1149 = vmatpush1.msra.mxu0 %v254
  %1150 = vmatprep.subr.mxu0 0.0
  %1151 = vmatpush1.msra.mxu0 %v251
  %1152 = vmatprep.subr.mxu0 0.0
  %1153 = vmatpush1.msra.mxu0 %v248
  %1154 = vmatprep.subr.mxu0 0.0
  %1155 = vmatpush1.msra.mxu0 %v245
  %1156 = vmatprep.subr.mxu0 0.0
  %1157 = vmatpush1.msra.mxu0 %v242
  %1158 = vmatprep.subr.mxu0 0.0
  %1159 = vmatpush1.msra.mxu0 %v239
  %1160 = vmatprep.subr.mxu0 0.0
  %1161 = vmatpush1.msra.mxu0 %v236
  %1162 = vmatprep.subr.mxu0 0.0
  %1163 = vmatpush1.msra.mxu0 %v233
  %1164 = vmatprep.subr.mxu0 0.0
  %1165 = vmatpush1.msra.mxu0 %v230
  %1166 = vmatprep.subr.mxu0 0.0
  %1167 = vmatpush1.msra.mxu0 %v227
  %1168 = vmatprep.subr.mxu0 0.0
  %1169 = vmatpush1.msra.mxu0 %v224
  %1170 = vmatprep.subr.mxu0 0.0
  %1171 = vmatpush1.msra.mxu0 %v221
  %1172 = vmatprep.subr.mxu0 0.0
  %1173 = vmatpush1.msra.mxu0 %v218
  %1174 = vmatprep.subr.mxu0 0.0
  %1175 = vmatpush1.msra.mxu0 %v215
  %1176 = vmatprep.subr.mxu0 0.0
  %1177 = vmatpush2.msra.mxu0 0.0
  %1178 = vmatprep.subr.mxu0 0.0
  %1179 = vmatpush2.msra.mxu0 0.0
  %1180 = vmatprep.subr.mxu0 0.0
  %1181 = vmatpush2.msra.mxu0 0.0
  %1182 = vmatprep.subr.mxu0 0.0
  %1183 = vmatpush2.msra.mxu0 0.0
  %1184 = vmatprep.subr.mxu0 0.0
  %1185 = vmatpush2.msra.mxu0 0.0
  %1186 = vmatprep.subr.mxu0 0.0
  %1187 = vmatpush2.msra.mxu0 0.0
  %1188 = vmatprep.subr.mxu0 0.0
  %1189 = vmatpush2.msra.mxu0 0.0
  %1190 = vmatprep.subr.mxu0 0.0
  %1191 = vmatpush2.msra.mxu0 0.0
  %1192 = vmatprep.subr.mxu0 0.0
  %1193 = vmatpush2.msra.mxu0 0.0
  %1194 = vmatprep.subr.mxu0 0.0
  %1195 = vmatpush2.msra.mxu0 0.0
  %1196 = vmatprep.subr.mxu0 0.0
  %1197 = vmatpush2.msra.mxu0 0.0
  %1198 = vmatprep.subr.mxu0 0.0
  %1199 = vmatpush2.msra.mxu0 0.0
  %1200 = vmatprep.subr.mxu0 0.0
  %1201 = vmatpush2.msra.mxu0 0.0
  %1202 = vmatprep.subr.mxu0 0.0
  %1203 = vmatpush2.msra.mxu0 0.0
  %1204 = vmatprep.subr.mxu0 0.0
  %1205 = vmatpush2.msra.mxu0 0.0
  %1206 = vmatprep.subr.mxu0 0.0
  %1207 = vmatpush2.msra.mxu0 0.0
  %1208 = vmatprep.mubr.f32.mxu0 0.0
  %1209 = vmatmul.mubr.f32.gmra.mxu0 %v1071
  %v1210 = vpop.f32.mrf.mxu0
  %v1211 = vadd.f32 0.0, %v1210
  %v1212 = vpop.f32.mrf.mxu0
  %1213 = vdwg.mxu0
  %v1215 = vrot.slane %v1140, 4
  %v1216 = vrot.slane %v1140, 5
  %v1219 = vadd.f32 %v128, %v1215
  %v1220 = vadd.f32 %v134, %v1216
  %v1221 = vmul.f32 %v1219, 0.5
  %v1222 = vmul.f32 %v1220, 0.5
  %v1223 = vtanh.pop %v1221
  %v1224 = vtanh.pop %v1222
  %v1225 = vmul.f32 %v1223, 0.5
  %v1226 = vmul.f32 %v1224, 0.5
  %v1227 = vadd.f32 %v1225, 0.5
  %v1228 = vadd.f32 %v1226, 0.5
  %v1230 = vrot.slane %v1142, 4
  %v1231 = vrot.slane %v1142, 5
  %v1234 = vadd.f32 %v130, %v1230
  %v1235 = vadd.f32 %v136, %v1231
  %v1236 = vmul.f32 %v1234, 0.5
  %v1237 = vmul.f32 %v1235, 0.5
  %v1238 = vtanh.pop %v1236
  %v1239 = vtanh.pop %v1237
  %v1240 = vmul.f32 %v1238, 0.5
  %v1241 = vmul.f32 %v1239, 0.5
  %v1242 = vadd.f32 %v1240, 0.5
  %v1243 = vadd.f32 %v1241, 0.5
  %v1244 = vadd.f32 %v1211, %v266
  %v1246 = vrot.slane %v1244, 4
  %v1247 = vrot.slane %v1244, 5
  %v1250 = vmul.f32 %v1227, %v1246
  %v1251 = vmul.f32 %v1228, %v1247
  %v1252 = vadd.f32 %v205, %v1250
  %v1253 = vadd.f32 %v210, %v1251
  %v1254 = vtanh.pop %v1252
  %v1255 = vtanh.pop %v1253
  %v1256 = vsub.f32 1.0, %v1242
  %v1257 = vsub.f32 1.0, %v1243
  %v1258 = vmul.f32 %v1256, %v1254
  %v1259 = vmul.f32 %v1257, %v1255
  %v1260 = vrot.slane %v1063, 7
  %v1261 = vrot.slane %v1064, 7
  %v1264 = vmul.f32 %v1242, %v1260
  %v1265 = vmul.f32 %v1243, %v1261
  %v1266 = vadd.f32 %v1258, %v1264
  %v1267 = vadd.f32 %v1259, %v1265
  %1268 = vst [vmem:[%s6] sm:$0x10] %v1266
  %1269 = vst [vmem:[%s6 + $0x8] sm:$0x10] %v1267
  %v1272 = vrot.slane %v1266, 4
  %v1273 = vrot.slane %v1267, 3
  %v1274 = vsel %vm466, %v1273, %v1272
  %1276 = vmatprep.subr.mxu0 %v259
  %1277 = vmatpush1.msra.mxu0 %v258
  %1278 = vmatprep.subr.mxu0 %v256
  %1279 = vmatpush1.msra.mxu0 %v255
  %1280 = vmatprep.subr.mxu0 %v253
  %1281 = vmatpush1.msra.mxu0 %v252
  %1282 = vmatprep.subr.mxu0 %v250
  %1283 = vmatpush1.msra.mxu0 %v249
  %1284 = vmatprep.subr.mxu0 %v247
  %1285 = vmatpush1.msra.mxu0 %v246
  %1286 = vmatprep.subr.mxu0 %v244
  %1287 = vmatpush1.msra.mxu0 %v243
  %1288 = vmatprep.subr.mxu0 %v241
  %1289 = vmatpush1.msra.mxu0 %v240
  %1290 = vmatprep.subr.mxu0 %v238
  %1291 = vmatpush1.msra.mxu0 %v237
  %1292 = vmatprep.subr.mxu0 %v235
  %1293 = vmatpush1.msra.mxu0 %v234
  %1294 = vmatprep.subr.mxu0 %v232
  %1295 = vmatpush1.msra.mxu0 %v231
  %1296 = vmatprep.subr.mxu0 %v229
  %1297 = vmatpush1.msra.mxu0 %v228
  %1298 = vmatprep.subr.mxu0 %v226
  %1299 = vmatpush1.msra.mxu0 %v225
  %1300 = vmatprep.subr.mxu0 %v223
  %1301 = vmatpush1.msra.mxu0 %v222
  %1302 = vmatprep.subr.mxu0 %v220
  %1303 = vmatpush1.msra.mxu0 %v219
  %1304 = vmatprep.subr.mxu0 %v217
  %1305 = vmatpush1.msra.mxu0 %v216
  %1306 = vmatprep.subr.mxu0 %v214
  %1307 = vmatpush1.msra.mxu0 %v213
  %1308 = vmatprep.subr.mxu0 0.0
  %1309 = vmatpush2.msra.mxu0 0.0
  %1310 = vmatprep.subr.mxu0 0.0
  %1311 = vmatpush2.msra.mxu0 0.0
  %1312 = vmatprep.subr.mxu0 0.0
  %1313 = vmatpush2.msra.mxu0 0.0
  %1314 = vmatprep.subr.mxu0 0.0
  %1315 = vmatpush2.msra.mxu0 0.0
  %1316 = vmatprep.subr.mxu0 0.0
  %1317 = vmatpush2.msra.mxu0 0.0
  %1318 = vmatprep.subr.mxu0 0.0
  %1319 = vmatpush2.msra.mxu0 0.0
  %1320 = vmatprep.subr.mxu0 0.0
  %1321 = vmatpush2.msra.mxu0 0.0
  %1322 = vmatprep.subr.mxu0 0.0
  %1323 = vmatpush2.msra.mxu0 0.0
  %1324 = vmatprep.subr.mxu0 0.0
  %1325 = vmatpush2.msra.mxu0 0.0
  %1326 = vmatprep.subr.mxu0 0.0
  %1327 = vmatpush2.msra.mxu0 0.0
  %1328 = vmatprep.subr.mxu0 0.0
  %1329 = vmatpush2.msra.mxu0 0.0
  %1330 = vmatprep.subr.mxu0 0.0
  %1331 = vmatpush2.msra.mxu0 0.0
  %1332 = vmatprep.subr.mxu0 0.0
  %1333 = vmatpush2.msra.mxu0 0.0
  %1334 = vmatprep.subr.mxu0 0.0
  %1335 = vmatpush2.msra.mxu0 0.0
  %1336 = vmatprep.subr.mxu0 0.0
  %1337 = vmatpush2.msra.mxu0 0.0
  %1338 = vmatprep.subr.mxu0 0.0
  %1339 = vmatpush2.msra.mxu0 0.0
  %1340 = vmatprep.mubr.f32.mxu0 0.0
  %1341 = vmatmul.mubr.f32.gmra.mxu0 %v1274
  %v1342 = vpop.f32.mrf.mxu0
  %v1343 = vadd.f32 0.0, %v1342
  %v1344 = vpop.f32.mrf.mxu0
  %v1345 = vadd.f32 0.0, %v1344
  %1346 = vdwg.mxu0
  %1347 = vmatprep.subr.mxu0 0.0
  %1348 = vmatpush1.msra.mxu0 %v260
  %1349 = vmatprep.subr.mxu0 0.0
  %1350 = vmatpush1.msra.mxu0 %v257
  %1351 = vmatprep.subr.mxu0 0.0
  %1352 = vmatpush1.msra.mxu0 %v254
  %1353 = vmatprep.subr.mxu0 0.0
  %1354 = vmatpush1.msra.mxu0 %v251
  %1355 = vmatprep.subr.mxu0 0.0
  %1356 = vmatpush1.msra.mxu0 %v248
  %1357 = vmatprep.subr.mxu0 0.0
  %1358 = vmatpush1.msra.mxu0 %v245
  %1359 = vmatprep.subr.mxu0 0.0
  %1360 = vmatpush1.msra.mxu0 %v242
  %1361 = vmatprep.subr.mxu0 0.0
  %1362 = vmatpush1.msra.mxu0 %v239
  %1363 = vmatprep.subr.mxu0 0.0
  %1364 = vmatpush1.msra.mxu0 %v236
  %1365 = vmatprep.subr.mxu0 0.0
  %1366 = vmatpush1.msra.mxu0 %v233
  %1367 = vmatprep.subr.mxu0 0.0
  %1368 = vmatpush1.msra.mxu0 %v230
  %1369 = vmatprep.subr.mxu0 0.0
  %1370 = vmatpush1.msra.mxu0 %v227
  %1371 = vmatprep.subr.mxu0 0.0
  %1372 = vmatpush1.msra.mxu0 %v224
  %1373 = vmatprep.subr.mxu0 0.0
  %1374 = vmatpush1.msra.mxu0 %v221
  %1375 = vmatprep.subr.mxu0 0.0
  %1376 = vmatpush1.msra.mxu0 %v218
  %1377 = vmatprep.subr.mxu0 0.0
  %1378 = vmatpush1.msra.mxu0 %v215
  %1379 = vmatprep.subr.mxu0 0.0
  %1380 = vmatpush2.msra.mxu0 0.0
  %1381 = vmatprep.subr.mxu0 0.0
  %1382 = vmatpush2.msra.mxu0 0.0
  %1383 = vmatprep.subr.mxu0 0.0
  %1384 = vmatpush2.msra.mxu0 0.0
  %1385 = vmatprep.subr.mxu0 0.0
  %1386 = vmatpush2.msra.mxu0 0.0
  %1387 = vmatprep.subr.mxu0 0.0
  %1388 = vmatpush2.msra.mxu0 0.0
  %1389 = vmatprep.subr.mxu0 0.0
  %1390 = vmatpush2.msra.mxu0 0.0
  %1391 = vmatprep.subr.mxu0 0.0
  %1392 = vmatpush2.msra.mxu0 0.0
  %1393 = vmatprep.subr.mxu0 0.0
  %1394 = vmatpush2.msra.mxu0 0.0
  %1395 = vmatprep.subr.mxu0 0.0
  %1396 = vmatpush2.msra.mxu0 0.0
  %1397 = vmatprep.subr.mxu0 0.0
  %1398 = vmatpush2.msra.mxu0 0.0
  %1399 = vmatprep.subr.mxu0 0.0
  %1400 = vmatpush2.msra.mxu0 0.0
  %1401 = vmatprep.subr.mxu0 0.0
  %1402 = vmatpush2.msra.mxu0 0.0
  %1403 = vmatprep.subr.mxu0 0.0
  %1404 = vmatpush2.msra.mxu0 0.0
  %1405 = vmatprep.subr.mxu0 0.0
  %1406 = vmatpush2.msra.mxu0 0.0
  %1407 = vmatprep.subr.mxu0 0.0
  %1408 = vmatpush2.msra.mxu0 0.0
  %1409 = vmatprep.subr.mxu0 0.0
  %1410 = vmatpush2.msra.mxu0 0.0
  %1411 = vmatprep.mubr.f32.mxu0 0.0
  %1412 = vmatmul.mubr.f32.gmra.mxu0 %v1274
  %v1413 = vpop.f32.mrf.mxu0
  %v1414 = vadd.f32 0.0, %v1413
  %v1415 = vpop.f32.mrf.mxu0
  %1416 = vdwg.mxu0
  %v1418 = vrot.slane %v1343, 3
  %v1419 = vrot.slane %v1343, 4
  %v1422 = vadd.f32 %v128, %v1418
  %v1423 = vadd.f32 %v134, %v1419
  %v1424 = vmul.f32 %v1422, 0.5
  %v1425 = vmul.f32 %v1423, 0.5
  %v1426 = vtanh.pop %v1424
  %v1427 = vtanh.pop %v1425
  %v1428 = vmul.f32 %v1426, 0.5
  %v1429 = vmul.f32 %v1427, 0.5
  %v1430 = vadd.f32 %v1428, 0.5
  %v1431 = vadd.f32 %v1429, 0.5
  %v1433 = vrot.slane %v1345, 3
  %v1434 = vrot.slane %v1345, 4
  %v1437 = vadd.f32 %v130, %v1433
  %v1438 = vadd.f32 %v136, %v1434
  %v1439 = vmul.f32 %v1437, 0.5
  %v1440 = vmul.f32 %v1438, 0.5
  %v1441 = vtanh.pop %v1439
  %v1442 = vtanh.pop %v1440
  %v1443 = vmul.f32 %v1441, 0.5
  %v1444 = vmul.f32 %v1442, 0.5
  %v1445 = vadd.f32 %v1443, 0.5
  %v1446 = vadd.f32 %v1444, 0.5
  %v1447 = vadd.f32 %v1414, %v266
  %v1449 = vrot.slane %v1447, 3
  %v1450 = vrot.slane %v1447, 4
  %v1453 = vmul.f32 %v1430, %v1449
  %v1454 = vmul.f32 %v1431, %v1450
  %v1455 = vadd.f32 %v205, %v1453
  %v1456 = vadd.f32 %v210, %v1454
  %v1457 = vtanh.pop %v1455
  %v1458 = vtanh.pop %v1456
  %v1459 = vsub.f32 1.0, %v1445
  %v1460 = vsub.f32 1.0, %v1446
  %v1461 = vmul.f32 %v1459, %v1457
  %v1462 = vmul.f32 %v1460, %v1458
  %v1463 = vrot.slane %v1266, 7
  %v1464 = vrot.slane %v1267, 7
  %v1467 = vmul.f32 %v1445, %v1463
  %v1468 = vmul.f32 %v1446, %v1464
  %v1469 = vadd.f32 %v1461, %v1467
  %v1470 = vadd.f32 %v1462, %v1468
  %1471 = vst [vmem:[%s6] sm:$0x20] %v1469
  %1472 = vst [vmem:[%s6 + $0x8] sm:$0x20] %v1470
  %v1475 = vrot.slane %v1469, 5
  %v1476 = vrot.slane %v1470, 4
  %v1477 = vsel %vm466, %v1476, %v1475
  %1479 = vmatprep.subr.mxu0 %v259
  %1480 = vmatpush1.msra.mxu0 %v258
  %1481 = vmatprep.subr.mxu0 %v256
  %1482 = vmatpush1.msra.mxu0 %v255
  %1483 = vmatprep.subr.mxu0 %v253
  %1484 = vmatpush1.msra.mxu0 %v252
  %1485 = vmatprep.subr.mxu0 %v250
  %1486 = vmatpush1.msra.mxu0 %v249
  %1487 = vmatprep.subr.mxu0 %v247
  %1488 = vmatpush1.msra.mxu0 %v246
  %1489 = vmatprep.subr.mxu0 %v244
  %1490 = vmatpush1.msra.mxu0 %v243
  %1491 = vmatprep.subr.mxu0 %v241
  %1492 = vmatpush1.msra.mxu0 %v240
  %1493 = vmatprep.subr.mxu0 %v238
  %1494 = vmatpush1.msra.mxu0 %v237
  %1495 = vmatprep.subr.mxu0 %v235
  %1496 = vmatpush1.msra.mxu0 %v234
  %1497 = vmatprep.subr.mxu0 %v232
  %1498 = vmatpush1.msra.mxu0 %v231
  %1499 = vmatprep.subr.mxu0 %v229
  %1500 = vmatpush1.msra.mxu0 %v228
  %1501 = vmatprep.subr.mxu0 %v226
  %1502 = vmatpush1.msra.mxu0 %v225
  %1503 = vmatprep.subr.mxu0 %v223
  %1504 = vmatpush1.msra.mxu0 %v222
  %1505 = vmatprep.subr.mxu0 %v220
  %1506 = vmatpush1.msra.mxu0 %v219
  %1507 = vmatprep.subr.mxu0 %v217
  %1508 = vmatpush1.msra.mxu0 %v216
  %1509 = vmatprep.subr.mxu0 %v214
  %1510 = vmatpush1.msra.mxu0 %v213
  %1511 = vmatprep.subr.mxu0 0.0
  %1512 = vmatpush2.msra.mxu0 0.0
  %1513 = vmatprep.subr.mxu0 0.0
  %1514 = vmatpush2.msra.mxu0 0.0
  %1515 = vmatprep.subr.mxu0 0.0
  %1516 = vmatpush2.msra.mxu0 0.0
  %1517 = vmatprep.subr.mxu0 0.0
  %1518 = vmatpush2.msra.mxu0 0.0
  %1519 = vmatprep.subr.mxu0 0.0
  %1520 = vmatpush2.msra.mxu0 0.0
  %1521 = vmatprep.subr.mxu0 0.0
  %1522 = vmatpush2.msra.mxu0 0.0
  %1523 = vmatprep.subr.mxu0 0.0
  %1524 = vmatpush2.msra.mxu0 0.0
  %1525 = vmatprep.subr.mxu0 0.0
  %1526 = vmatpush2.msra.mxu0 0.0
  %1527 = vmatprep.subr.mxu0 0.0
  %1528 = vmatpush2.msra.mxu0 0.0
  %1529 = vmatprep.subr.mxu0 0.0
  %1530 = vmatpush2.msra.mxu0 0.0
  %1531 = vmatprep.subr.mxu0 0.0
  %1532 = vmatpush2.msra.mxu0 0.0
  %1533 = vmatprep.subr.mxu0 0.0
  %1534 = vmatpush2.msra.mxu0 0.0
  %1535 = vmatprep.subr.mxu0 0.0
  %1536 = vmatpush2.msra.mxu0 0.0
  %1537 = vmatprep.subr.mxu0 0.0
  %1538 = vmatpush2.msra.mxu0 0.0
  %1539 = vmatprep.subr.mxu0 0.0
  %1540 = vmatpush2.msra.mxu0 0.0
  %1541 = vmatprep.subr.mxu0 0.0
  %1542 = vmatpush2.msra.mxu0 0.0
  %1543 = vmatprep.mubr.f32.mxu0 0.0
  %1544 = vmatmul.mubr.f32.gmra.mxu0 %v1477
  %v1545 = vpop.f32.mrf.mxu0
  %v1546 = vadd.f32 0.0, %v1545
  %v1547 = vpop.f32.mrf.mxu0
  %v1548 = vadd.f32 0.0, %v1547
  %1549 = vdwg.mxu0
  %1550 = vmatprep.subr.mxu0 0.0
  %1551 = vmatpush1.msra.mxu0 %v260
  %1552 = vmatprep.subr.mxu0 0.0
  %1553 = vmatpush1.msra.mxu0 %v257
  %1554 = vmatprep.subr.mxu0 0.0
  %1555 = vmatpush1.msra.mxu0 %v254
  %1556 = vmatprep.subr.mxu0 0.0
  %1557 = vmatpush1.msra.mxu0 %v251
  %1558 = vmatprep.subr.mxu0 0.0
  %1559 = vmatpush1.msra.mxu0 %v248
  %1560 = vmatprep.subr.mxu0 0.0
  %1561 = vmatpush1.msra.mxu0 %v245
  %1562 = vmatprep.subr.mxu0 0.0
  %1563 = vmatpush1.msra.mxu0 %v242
  %1564 = vmatprep.subr.mxu0 0.0
  %1565 = vmatpush1.msra.mxu0 %v239
  %1566 = vmatprep.subr.mxu0 0.0
  %1567 = vmatpush1.msra.mxu0 %v236
  %1568 = vmatprep.subr.mxu0 0.0
  %1569 = vmatpush1.msra.mxu0 %v233
  %1570 = vmatprep.subr.mxu0 0.0
  %1571 = vmatpush1.msra.mxu0 %v230
  %1572 = vmatprep.subr.mxu0 0.0
  %1573 = vmatpush1.msra.mxu0 %v227
  %1574 = vmatprep.subr.mxu0 0.0
  %1575 = vmatpush1.msra.mxu0 %v224
  %1576 = vmatprep.subr.mxu0 0.0
  %1577 = vmatpush1.msra.mxu0 %v221
  %1578 = vmatprep.subr.mxu0 0.0
  %1579 = vmatpush1.msra.mxu0 %v218
  %1580 = vmatprep.subr.mxu0 0.0
  %1581 = vmatpush1.msra.mxu0 %v215
  %1582 = vmatprep.subr.mxu0 0.0
  %1583 = vmatpush2.msra.mxu0 0.0
  %1584 = vmatprep.subr.mxu0 0.0
  %1585 = vmatpush2.msra.mxu0 0.0
  %1586 = vmatprep.subr.mxu0 0.0
  %1587 = vmatpush2.msra.mxu0 0.0
  %1588 = vmatprep.subr.mxu0 0.0
  %1589 = vmatpush2.msra.mxu0 0.0
  %1590 = vmatprep.subr.mxu0 0.0
  %1591 = vmatpush2.msra.mxu0 0.0
  %1592 = vmatprep.subr.mxu0 0.0
  %1593 = vmatpush2.msra.mxu0 0.0
  %1594 = vmatprep.subr.mxu0 0.0
  %1595 = vmatpush2.msra.mxu0 0.0
  %1596 = vmatprep.subr.mxu0 0.0
  %1597 = vmatpush2.msra.mxu0 0.0
  %1598 = vmatprep.subr.mxu0 0.0
  %1599 = vmatpush2.msra.mxu0 0.0
  %1600 = vmatprep.subr.mxu0 0.0
  %1601 = vmatpush2.msra.mxu0 0.0
  %1602 = vmatprep.subr.mxu0 0.0
  %1603 = vmatpush2.msra.mxu0 0.0
  %1604 = vmatprep.subr.mxu0 0.0
  %1605 = vmatpush2.msra.mxu0 0.0
  %1606 = vmatprep.subr.mxu0 0.0
  %1607 = vmatpush2.msra.mxu0 0.0
  %1608 = vmatprep.subr.mxu0 0.0
  %1609 = vmatpush2.msra.mxu0 0.0
  %1610 = vmatprep.subr.mxu0 0.0
  %1611 = vmatpush2.msra.mxu0 0.0
  %1612 = vmatprep.subr.mxu0 0.0
  %1613 = vmatpush2.msra.mxu0 0.0
  %1614 = vmatprep.mubr.f32.mxu0 0.0
  %1615 = vmatmul.mubr.f32.gmra.mxu0 %v1477
  %v1616 = vpop.f32.mrf.mxu0
  %v1617 = vadd.f32 0.0, %v1616
  %v1618 = vpop.f32.mrf.mxu0
  %1619 = vdwg.mxu0
  %v1621 = vrot.slane %v1546, 2
  %v1622 = vrot.slane %v1546, 3
  %v1625 = vadd.f32 %v128, %v1621
  %v1626 = vadd.f32 %v134, %v1622
  %v1627 = vmul.f32 %v1625, 0.5
  %v1628 = vmul.f32 %v1626, 0.5
  %v1629 = vtanh.pop %v1627
  %v1630 = vtanh.pop %v1628
  %v1631 = vmul.f32 %v1629, 0.5
  %v1632 = vmul.f32 %v1630, 0.5
  %v1633 = vadd.f32 %v1631, 0.5
  %v1634 = vadd.f32 %v1632, 0.5
  %v1636 = vrot.slane %v1548, 2
  %v1637 = vrot.slane %v1548, 3
  %v1640 = vadd.f32 %v130, %v1636
  %v1641 = vadd.f32 %v136, %v1637
  %v1642 = vmul.f32 %v1640, 0.5
  %v1643 = vmul.f32 %v1641, 0.5
  %v1644 = vtanh.pop %v1642
  %v1645 = vtanh.pop %v1643
  %v1646 = vmul.f32 %v1644, 0.5
  %v1647 = vmul.f32 %v1645, 0.5
  %v1648 = vadd.f32 %v1646, 0.5
  %v1649 = vadd.f32 %v1647, 0.5
  %v1650 = vadd.f32 %v1617, %v266
  %v1652 = vrot.slane %v1650, 2
  %v1653 = vrot.slane %v1650, 3
  %v1656 = vmul.f32 %v1633, %v1652
  %v1657 = vmul.f32 %v1634, %v1653
  %v1658 = vadd.f32 %v205, %v1656
  %v1659 = vadd.f32 %v210, %v1657
  %v1660 = vtanh.pop %v1658
  %v1661 = vtanh.pop %v1659
  %v1662 = vsub.f32 1.0, %v1648
  %v1663 = vsub.f32 1.0, %v1649
  %v1664 = vmul.f32 %v1662, %v1660
  %v1665 = vmul.f32 %v1663, %v1661
  %v1666 = vrot.slane %v1469, 7
  %v1667 = vrot.slane %v1470, 7
  %v1670 = vmul.f32 %v1648, %v1666
  %v1671 = vmul.f32 %v1649, %v1667
  %v1672 = vadd.f32 %v1664, %v1670
  %v1673 = vadd.f32 %v1665, %v1671
  %1674 = vst [vmem:[%s6] sm:$0x40] %v1672
  %1675 = vst [vmem:[%s6 + $0x8] sm:$0x40] %v1673
  %v1678 = vrot.slane %v1672, 6
  %v1679 = vrot.slane %v1673, 5
  %v1680 = vsel %vm466, %v1679, %v1678
  %1682 = vmatprep.subr.mxu0 %v259
  %1683 = vmatpush1.msra.mxu0 %v258
  %1684 = vmatprep.subr.mxu0 %v256
  %1685 = vmatpush1.msra.mxu0 %v255
  %1686 = vmatprep.subr.mxu0 %v253
  %1687 = vmatpush1.msra.mxu0 %v252
  %1688 = vmatprep.subr.mxu0 %v250
  %1689 = vmatpush1.msra.mxu0 %v249
  %1690 = vmatprep.subr.mxu0 %v247
  %1691 = vmatpush1.msra.mxu0 %v246
  %1692 = vmatprep.subr.mxu0 %v244
  %1693 = vmatpush1.msra.mxu0 %v243
  %1694 = vmatprep.subr.mxu0 %v241
  %1695 = vmatpush1.msra.mxu0 %v240
  %1696 = vmatprep.subr.mxu0 %v238
  %1697 = vmatpush1.msra.mxu0 %v237
  %1698 = vmatprep.subr.mxu0 %v235
  %1699 = vmatpush1.msra.mxu0 %v234
  %1700 = vmatprep.subr.mxu0 %v232
  %1701 = vmatpush1.msra.mxu0 %v231
  %1702 = vmatprep.subr.mxu0 %v229
  %1703 = vmatpush1.msra.mxu0 %v228
  %1704 = vmatprep.subr.mxu0 %v226
  %1705 = vmatpush1.msra.mxu0 %v225
  %1706 = vmatprep.subr.mxu0 %v223
  %1707 = vmatpush1.msra.mxu0 %v222
  %1708 = vmatprep.subr.mxu0 %v220
  %1709 = vmatpush1.msra.mxu0 %v219
  %1710 = vmatprep.subr.mxu0 %v217
  %1711 = vmatpush1.msra.mxu0 %v216
  %1712 = vmatprep.subr.mxu0 %v214
  %1713 = vmatpush1.msra.mxu0 %v213
  %1714 = vmatprep.subr.mxu0 0.0
  %1715 = vmatpush2.msra.mxu0 0.0
  %1716 = vmatprep.subr.mxu0 0.0
  %1717 = vmatpush2.msra.mxu0 0.0
  %1718 = vmatprep.subr.mxu0 0.0
  %1719 = vmatpush2.msra.mxu0 0.0
  %1720 = vmatprep.subr.mxu0 0.0
  %1721 = vmatpush2.msra.mxu0 0.0
  %1722 = vmatprep.subr.mxu0 0.0
  %1723 = vmatpush2.msra.mxu0 0.0
  %1724 = vmatprep.subr.mxu0 0.0
  %1725 = vmatpush2.msra.mxu0 0.0
  %1726 = vmatprep.subr.mxu0 0.0
  %1727 = vmatpush2.msra.mxu0 0.0
  %1728 = vmatprep.subr.mxu0 0.0
  %1729 = vmatpush2.msra.mxu0 0.0
  %1730 = vmatprep.subr.mxu0 0.0
  %1731 = vmatpush2.msra.mxu0 0.0
  %1732 = vmatprep.subr.mxu0 0.0
  %1733 = vmatpush2.msra.mxu0 0.0
  %1734 = vmatprep.subr.mxu0 0.0
  %1735 = vmatpush2.msra.mxu0 0.0
  %1736 = vmatprep.subr.mxu0 0.0
  %1737 = vmatpush2.msra.mxu0 0.0
  %1738 = vmatprep.subr.mxu0 0.0
  %1739 = vmatpush2.msra.mxu0 0.0
  %1740 = vmatprep.subr.mxu0 0.0
  %1741 = vmatpush2.msra.mxu0 0.0
  %1742 = vmatprep.subr.mxu0 0.0
  %1743 = vmatpush2.msra.mxu0 0.0
  %1744 = vmatprep.subr.mxu0 0.0
  %1745 = vmatpush2.msra.mxu0 0.0
  %1746 = vmatprep.mubr.f32.mxu0 0.0
  %1747 = vmatmul.mubr.f32.gmra.mxu0 %v1680
  %v1748 = vpop.f32.mrf.mxu0
  %v1749 = vadd.f32 0.0, %v1748
  %v1750 = vpop.f32.mrf.mxu0
  %v1751 = vadd.f32 0.0, %v1750
  %1752 = vdwg.mxu0
  %1753 = vmatprep.subr.mxu0 0.0
  %1754 = vmatpush1.msra.mxu0 %v260
  %1755 = vmatprep.subr.mxu0 0.0
  %1756 = vmatpush1.msra.mxu0 %v257
  %1757 = vmatprep.subr.mxu0 0.0
  %1758 = vmatpush1.msra.mxu0 %v254
  %1759 = vmatprep.subr.mxu0 0.0
  %1760 = vmatpush1.msra.mxu0 %v251
  %1761 = vmatprep.subr.mxu0 0.0
  %1762 = vmatpush1.msra.mxu0 %v248
  %1763 = vmatprep.subr.mxu0 0.0
  %1764 = vmatpush1.msra.mxu0 %v245
  %1765 = vmatprep.subr.mxu0 0.0
  %1766 = vmatpush1.msra.mxu0 %v242
  %1767 = vmatprep.subr.mxu0 0.0
  %1768 = vmatpush1.msra.mxu0 %v239
  %1769 = vmatprep.subr.mxu0 0.0
  %1770 = vmatpush1.msra.mxu0 %v236
  %1771 = vmatprep.subr.mxu0 0.0
  %1772 = vmatpush1.msra.mxu0 %v233
  %1773 = vmatprep.subr.mxu0 0.0
  %1774 = vmatpush1.msra.mxu0 %v230
  %1775 = vmatprep.subr.mxu0 0.0
  %1776 = vmatpush1.msra.mxu0 %v227
  %1777 = vmatprep.subr.mxu0 0.0
  %1778 = vmatpush1.msra.mxu0 %v224
  %1779 = vmatprep.subr.mxu0 0.0
  %1780 = vmatpush1.msra.mxu0 %v221
  %1781 = vmatprep.subr.mxu0 0.0
  %1782 = vmatpush1.msra.mxu0 %v218
  %1783 = vmatprep.subr.mxu0 0.0
  %1784 = vmatpush1.msra.mxu0 %v215
  %1785 = vmatprep.subr.mxu0 0.0
  %1786 = vmatpush2.msra.mxu0 0.0
  %1787 = vmatprep.subr.mxu0 0.0
  %1788 = vmatpush2.msra.mxu0 0.0
  %1789 = vmatprep.subr.mxu0 0.0
  %1790 = vmatpush2.msra.mxu0 0.0
  %1791 = vmatprep.subr.mxu0 0.0
  %1792 = vmatpush2.msra.mxu0 0.0
  %1793 = vmatprep.subr.mxu0 0.0
  %1794 = vmatpush2.msra.mxu0 0.0
  %1795 = vmatprep.subr.mxu0 0.0
  %1796 = vmatpush2.msra.mxu0 0.0
  %1797 = vmatprep.subr.mxu0 0.0
  %1798 = vmatpush2.msra.mxu0 0.0
  %1799 = vmatprep.subr.mxu0 0.0
  %1800 = vmatpush2.msra.mxu0 0.0
  %1801 = vmatprep.subr.mxu0 0.0
  %1802 = vmatpush2.msra.mxu0 0.0
  %1803 = vmatprep.subr.mxu0 0.0
  %1804 = vmatpush2.msra.mxu0 0.0
  %1805 = vmatprep.subr.mxu0 0.0
  %1806 = vmatpush2.msra.mxu0 0.0
  %1807 = vmatprep.subr.mxu0 0.0
  %1808 = vmatpush2.msra.mxu0 0.0
  %1809 = vmatprep.subr.mxu0 0.0
  %1810 = vmatpush2.msra.mxu0 0.0
  %1811 = vmatprep.subr.mxu0 0.0
  %1812 = vmatpush2.msra.mxu0 0.0
  %1813 = vmatprep.subr.mxu0 0.0
  %1814 = vmatpush2.msra.mxu0 0.0
  %1815 = vmatprep.subr.mxu0 0.0
  %1816 = vmatpush2.msra.mxu0 0.0
  %1817 = vmatprep.mubr.f32.mxu0 0.0
  %1818 = vmatmul.mubr.f32.gmra.mxu0 %v1680
  %v1819 = vpop.f32.mrf.mxu0
  %v1820 = vadd.f32 0.0, %v1819
  %v1821 = vpop.f32.mrf.mxu0
  %1822 = vdwg.mxu0
  %v1824 = vrot.slane %v1749, 1
  %v1825 = vrot.slane %v1749, 2
  %v1828 = vadd.f32 %v128, %v1824
  %v1829 = vadd.f32 %v134, %v1825
  %v1830 = vmul.f32 %v1828, 0.5
  %v1831 = vmul.f32 %v1829, 0.5
  %v1832 = vtanh.pop %v1830
  %v1833 = vtanh.pop %v1831
  %v1834 = vmul.f32 %v1832, 0.5
  %v1835 = vmul.f32 %v1833, 0.5
  %v1836 = vadd.f32 %v1834, 0.5
  %v1837 = vadd.f32 %v1835, 0.5
  %v1839 = vrot.slane %v1751, 1
  %v1840 = vrot.slane %v1751, 2
  %v1843 = vadd.f32 %v130, %v1839
  %v1844 = vadd.f32 %v136, %v1840
  %v1845 = vmul.f32 %v1843, 0.5
  %v1846 = vmul.f32 %v1844, 0.5
  %v1847 = vtanh.pop %v1845
  %v1848 = vtanh.pop %v1846
  %v1849 = vmul.f32 %v1847, 0.5
  %v1850 = vmul.f32 %v1848, 0.5
  %v1851 = vadd.f32 %v1849, 0.5
  %v1852 = vadd.f32 %v1850, 0.5
  %v1853 = vadd.f32 %v1820, %v266
  %v1855 = vrot.slane %v1853, 1
  %v1856 = vrot.slane %v1853, 2
  %v1859 = vmul.f32 %v1836, %v1855
  %v1860 = vmul.f32 %v1837, %v1856
  %v1861 = vadd.f32 %v205, %v1859
  %v1862 = vadd.f32 %v210, %v1860
  %v1863 = vtanh.pop %v1861
  %v1864 = vtanh.pop %v1862
  %v1865 = vsub.f32 1.0, %v1851
  %v1866 = vsub.f32 1.0, %v1852
  %v1867 = vmul.f32 %v1865, %v1863
  %v1868 = vmul.f32 %v1866, %v1864
  %v1869 = vrot.slane %v1672, 7
  %v1870 = vrot.slane %v1673, 7
  %v1873 = vmul.f32 %v1851, %v1869
  %v1874 = vmul.f32 %v1852, %v1870
  %v1875 = vadd.f32 %v1867, %v1873
  %v1876 = vadd.f32 %v1868, %v1874
  %1877 = vst [vmem:[%s6] sm:$0x80] %v1875
  %1878 = vst [vmem:[%s6 + $0x8] sm:$0x80] %v1876
  %v1881 = vrot.slane %v1876, 7
  %1884 = vst [vmem:[#allocation2 - $0x7] sm:$0x80] %v1875
  %1885 = vst [vmem:[#allocation2 + $0x1] sm:$0x1] %v1881
  // Predicated region
  $region30: #{rnn_encoder_forward.1} parent=0 // pred_check
    _
  $region31: #{rnn_encoder_forward.1} parent=0 // pred_check_branch
    %1887 = sbr.rel (0) target = $region33
  $region32: #{rnn_encoder_forward.1} parent=0 // pred_region
    _
  $region33: #{rnn_encoder_forward.1} parent=0 // pred_fallthru
    _
  // Predicated region
  $region34: #{rnn_encoder_forward.1} parent=0 // pred_check
    _
  $region35: #{rnn_encoder_forward.1} parent=0 // pred_check_branch
    %1889 = sbr.rel (0) target = $region37
  $region36: #{rnn_encoder_forward.1} parent=0 // pred_region
    _
  $region37: #{rnn_encoder_forward.1} parent=0 // pred_fallthru
    _

</llo_original>
